<compile_context>
chip_gen: v6e
topology: v6e:2x2x1
jax: 0.10.0
libtpu: 0.0.40
codegen_flags: <defaults>
</compile_context>

<pallas_src>
import functools

import jax
import jax.numpy as jnp
from jax import lax
from jax.experimental import pallas as pl
from jax.experimental.pallas import tpu as pltpu


# -----------------------------------------------------------------------------
# GRU recurrence kernel: one invocation per (layer, batch-tile); in-kernel
# time loop.  PyTorch gate order r, z, n:
#   r = sigmoid(gi_r + h W_hr)                 gi_r = x W_ir + b_ir + b_hr
#   z = sigmoid(gi_z + h W_hz)                 gi_z = x W_iz + b_iz + b_hz
#   n = tanh  (gi_n + r * (h W_hn + b_hn))     gi_n = x W_in + b_in
#   h' = (1 - z) * n + z * h
# -----------------------------------------------------------------------------
def _gru_recurrence_kernel(gi_ref, whh_ref, bhn_ref, out_ref):
    """gi_ref : (S, 3, Bt, H) f32  precomputed x-projection (biases folded)
       whh_ref: (3, H, H)    bf16  per-gate recurrent weights, h @ whh_ref[k]
       bhn_ref: (1, H)       f32   recurrent bias of the n gate
       out_ref: (S, Bt, H)   f32   per-step hidden states
    """
    S = gi_ref.shape[0]
    Bt, H = out_ref.shape[1], out_ref.shape[2]
    b_hn = bhn_ref[...]                                    # (1, H), hoisted

    def step(t, h):
        g = gi_ref[t]                                      # (3, Bt, H) f32
        h_b = h.astype(jnp.bfloat16)                       # MXU operand only
        gh_r = jnp.dot(h_b, whh_ref[0], preferred_element_type=jnp.float32)
        gh_z = jnp.dot(h_b, whh_ref[1], preferred_element_type=jnp.float32)
        gh_n = jnp.dot(h_b, whh_ref[2], preferred_element_type=jnp.float32)
        r = jax.nn.sigmoid(g[0] + gh_r)                    # gate math in f32
        z = jax.nn.sigmoid(g[1] + gh_z)
        n = jnp.tanh(g[2] + r * (gh_n + b_hn))
        h_new = n + z * (h - n)                            # == (1-z)*n + z*h
        out_ref[t] = h_new.astype(out_ref.dtype)
        return h_new

    h0 = jnp.zeros((Bt, H), jnp.float32)                   # nn.GRU default h0
    lax.fori_loop(0, S, step, h0, unroll=True)             # short fixed loop


def gru_layer(x, layer_params, *, b_tile=None):
    """One unidirectional GRU layer.  x: (S, B, E_in) f32 -> (S, B, H) f32."""
    S, B, _ = x.shape
    w_ih_g = layer_params["w_ih_g"]          # (E_in, 3, H) f32
    w_hh_g = layer_params["w_hh_g"]          # (3, H, H)    bf16
    b_gi = layer_params["b_gi"]              # (1, 3, 1, H) f32 (folded biases)
    b_hn = layer_params["b_hn"]              # (1, H)       f32
    H = w_hh_g.shape[-1]

    # Hoisted input projection: one batched matmul over all S*B rows (XLA),
    # gate-major so the kernel indexes gates on a leading dim (no lane slices).
    gi = jnp.einsum("sbe,egh->sgbh", x, w_ih_g,
                    preferred_element_type=jnp.float32) + b_gi   # (S, 3, B, H)

    # Sequential recurrence in a single Pallas invocation per batch tile.
    if b_tile is None:
        b_tile = B          # one tile at small B; if tiling, use multiples of 8
    nb = pl.cdiv(B, b_tile)
    return pl.pallas_call(
        _gru_recurrence_kernel,
        out_shape=jax.ShapeDtypeStruct((S, B, H), jnp.float32),
        grid_spec=pltpu.PrefetchScalarGridSpec(
            num_scalar_prefetch=0,
            grid=(nb,),                            # independent batch tiles
            in_specs=[
                pl.BlockSpec((S, 3, b_tile, H), lambda i: (0, 0, i, 0)),
                pl.BlockSpec((3, H, H), lambda i: (0, 0, 0)),
                pl.BlockSpec((1, H), lambda i: (0, 0)),
            ],
            out_specs=pl.BlockSpec((S, b_tile, H), lambda i: (0, i, 0)),
        ),
        compiler_params=pltpu.CompilerParams(
            dimension_semantics=("parallel",)),    # v7x: 2 TCs split the batch
    )(gi, w_hh_g, b_hn)


# -----------------------------------------------------------------------------
# Dense + sigmoid head.
# -----------------------------------------------------------------------------
def _dense_sigmoid_kernel(x_ref, w_ref, b_ref, o_ref):
    logits = jnp.dot(x_ref[...], w_ref[...],
                     preferred_element_type=jnp.float32) + b_ref[...]
    o_ref[...] = jax.nn.sigmoid(logits).astype(o_ref.dtype)


def dense_sigmoid(x_flat, w_t, b):
    B, _ = x_flat.shape
    O = w_t.shape[1]
    # Whole operands fit VMEM at these sizes; head is a negligible fraction of
    # runtime (output_size < 128 lanes is fine here).
    return pl.pallas_call(
        _dense_sigmoid_kernel,
        out_shape=jax.ShapeDtypeStruct((B, O), jnp.float32),
    )(x_flat, w_t, b.reshape(1, O))


# -----------------------------------------------------------------------------
# Full UniGRU forward.
# -----------------------------------------------------------------------------
def uni_gru_forward(params, x_tokens):
    """x_tokens: (seq_len, batch) int32 token ids -> (batch, output_size)."""
    S, B = x_tokens.shape
    emb = params["embedding"][x_tokens]                # (S, B, E), XLA gather
    h = emb.astype(jnp.float32)                        # dropout: eval identity
    for layer in params["gru_layers"]:
        h = gru_layer(h, layer)                        # (S, B, H)
    H = h.shape[-1]
    # output.view([-1, seq_len * num_units]) — exact row-major reshape of the
    # time-major output (faithfully reproduces PyTorch's batch/time mixing).
    flat = jnp.reshape(h, (-1, S * H))                 # (B, S*H)
    return dense_sigmoid(flat, params["dense_w_t"], params["dense_b"])


def init_params(key, vocab_size, embed_size, num_units, output_size, layers,
                seq_len):
    H = num_units
    scale = 1.0 / jnp.sqrt(H)
    ks = iter(jax.random.split(key, 1 + 4 * layers + 2))
    params = {
        "embedding": jax.random.normal(next(ks), (vocab_size, embed_size),
                                       jnp.float32) * 0.1,
    }
    gru_layers = []
    for l in range(layers):
        in_size = embed_size if l == 0 else H
        # PyTorch nn.GRU parameter shapes (gate order r, z, n).
        w_ih = jax.random.uniform(next(ks), (3 * H, in_size), jnp.float32,
                                  -scale, scale)
        w_hh = jax.random.uniform(next(ks), (3 * H, H), jnp.float32,
                                  -scale, scale)
        b_ih = jax.random.uniform(next(ks), (3 * H,), jnp.float32, -scale, scale)
        b_hh = jax.random.uniform(next(ks), (3 * H,), jnp.float32, -scale, scale)
        # Repack for the kernels.
        w_ih_g = jnp.transpose(w_ih.reshape(3, H, in_size), (2, 0, 1))  # (E,3,H)
        w_hh_g = jnp.transpose(w_hh.reshape(3, H, H), (0, 2, 1))        # (3,H,H)
        b_ih3 = b_ih.reshape(3, H)
        b_hh3 = b_hh.reshape(3, H)
        b_gi = jnp.stack([b_ih3[0] + b_hh3[0],        # r: fold b_ir + b_hr
                          b_ih3[1] + b_hh3[1],        # z: fold b_iz + b_hz
                          b_ih3[2]],                  # n: only b_in
                         axis=0).reshape(1, 3, 1, H)
        gru_layers.append({
            "w_ih_g": w_ih_g,
            "w_hh_g": w_hh_g.astype(jnp.bfloat16),    # bf16 MXU operand
            "b_gi": b_gi,
            "b_hn": b_hh3[2].reshape(1, H),
        })
    params["gru_layers"] = gru_layers
    # Dense head: torch.nn.Linear(seq_len * num_units, output_size).
    F = seq_len * H
    dscale = 1.0 / jnp.sqrt(F)
    dense_w = jax.random.uniform(next(ks), (output_size, F), jnp.float32,
                                 -dscale, dscale)
    dense_b = jax.random.uniform(next(ks), (output_size,), jnp.float32,
                                 -dscale, dscale)
    params["dense_w_t"] = dense_w.T                    # (S*H, O): flat @ W.T
    params["dense_b"] = dense_b
    return params


if __name__ == "__main__":
    vocab_size = 50
    embed_size = 16
    num_units = 32
    output_size = 4
    seq_len = 8
    batch_size = 2
    layers = 2

    key = jax.random.PRNGKey(0)
    k_par, k_x = jax.random.split(key)
    params = init_params(k_par, vocab_size, embed_size, num_units,
                         output_size, layers, seq_len)
    x_tokens = jax.random.randint(k_x, (seq_len, batch_size), 0, vocab_size,
                                  dtype=jnp.int32)

    fwd = jax.jit(functools.partial(uni_gru_forward, params))
    prediction = fwd(x_tokens)
    jax.block_until_ready(prediction)
    assert prediction.shape == (batch_size, output_size)
    assert bool(jnp.all(jnp.isfinite(prediction)))
    assert bool(jnp.all((prediction >= 0.0) & (prediction <= 1.0)))
    print("KERNEL_OK")
</pallas_src>

<mosaic_0001>
module attributes {stable_mosaic.version = 11 : i64} {
  func.func @_dense_sigmoid_kernel(%arg0: memref<2x256xf32, #tpu.memory_space<vmem>>, %arg1: memref<256x4xf32, #tpu.memory_space<vmem>>, %arg2: memref<1x4xf32, #tpu.memory_space<vmem>>, %arg3: memref<2x4xf32, #tpu.memory_space<vmem>>) attributes {dimension_semantics = [], scalar_prefetch = 0 : i64, scratch_operands = 0 : i64, tpu.core_type = #tpu.core_type<tc>} {
    %c0 = arith.constant 0 : index
    %c0_0 = arith.constant 0 : index
    %0 = vector.load %arg0[%c0, %c0_0] : memref<2x256xf32, #tpu.memory_space<vmem>>, vector<2x256xf32>
    %c0_1 = arith.constant 0 : index
    %c0_2 = arith.constant 0 : index
    %1 = vector.load %arg1[%c0_1, %c0_2] : memref<256x4xf32, #tpu.memory_space<vmem>>, vector<256x4xf32>
    %cst = arith.constant dense<0.000000e+00> : vector<2x4xf32>
    %2 = tpu.matmul %0, %1, %cst {dimension_numbers = #tpu.dot_dimension_numbers<[1], [0], [0], [1], [0, 0, 1, 1], [], []>} : vector<2x256xf32>, vector<256x4xf32>, vector<2x4xf32> -> vector<2x4xf32>
    %c0_3 = arith.constant 0 : index
    %c0_4 = arith.constant 0 : index
    %3 = vector.load %arg2[%c0_3, %c0_4] : memref<1x4xf32, #tpu.memory_space<vmem>>, vector<1x4xf32>
    %4 = vector.broadcast %3 : vector<1x4xf32> to vector<2x4xf32>
    %5 = arith.addf %2, %4 : vector<2x4xf32>
    %6 = arith.negf %5 : vector<2x4xf32>
    %7 = math.exp %6 : vector<2x4xf32>
    %cst_5 = arith.constant 1.000000e+00 : f32
    %8 = vector.broadcast %cst_5 : f32 to vector<2x4xf32>
    %9 = arith.addf %8, %7 : vector<2x4xf32>
    %10 = arith.divf %8, %9 : vector<2x4xf32>
    %c0_6 = arith.constant 0 : index
    %c0_7 = arith.constant 0 : index
    %11 = vector.load %arg3[%c0_6, %c0_7] : memref<2x4xf32, #tpu.memory_space<vmem>>, vector<2x4xf32>
    tpu.vector_store %arg3[%c0_6, %c0_7], %10 {strides = array<i32>} : memref<2x4xf32, #tpu.memory_space<vmem>>, vector<2x4xf32>,
    return
  }
}

module attributes {stable_mosaic.version = 11 : i64} {
  func.func @_gru_recurrence_kernel(%arg0: i32, %arg1: memref<8x3x2x32xf32, #tpu.memory_space<vmem>>, %arg2: memref<3x32x32xbf16, #tpu.memory_space<vmem>>, %arg3: memref<1x32xf32, #tpu.memory_space<vmem>>, %arg4: memref<8x2x32xf32, #tpu.memory_space<vmem>>) attributes {dimension_semantics = [#tpu.dimension_semantics<parallel>], iteration_bounds = array<i64: 1>, scalar_prefetch = 0 : i64, scratch_operands = 0 : i64, tpu.core_type = #tpu.core_type<tc>, window_params = [{transform_indices = @transform_0, window_bounds = array<i64: 8, 3, 2, 32>}, {pipeline_mode = #tpu.pipeline_mode<synchronous>, transform_indices = @transform_1, window_bounds = array<i64: 3, 32, 32>}, {pipeline_mode = #tpu.pipeline_mode<synchronous>, transform_indices = @transform_2, window_bounds = array<i64: 1, 32>}, {transform_indices = @transform_3, window_bounds = array<i64: 8, 2, 32>}]} {
    %c0 = arith.constant 0 : index
    %c0_0 = arith.constant 0 : index
    %0 = vector.load %arg3[%c0, %c0_0] : memref<1x32xf32, #tpu.memory_space<vmem>>, vector<1x32xf32>
    %cst = arith.constant 0.000000e+00 : f32
    %1 = vector.broadcast %cst : f32 to vector<2x32xf32>
    %c0_i32 = arith.constant 0 : i32
    %2 = arith.index_cast %c0_i32 : i32 to index
    %c0_1 = arith.constant 0 : index
    %c0_2 = arith.constant 0 : index
    %c0_3 = arith.constant 0 : index
    %3 = vector.load %arg1[%2, %c0_1, %c0_2, %c0_3] : memref<8x3x2x32xf32, #tpu.memory_space<vmem>>, vector<1x3x2x32xf32>
    %4 = vector.shape_cast %3 : vector<1x3x2x32xf32> to vector<3x2x32xf32>
    %5 = arith.truncf %1 : vector<2x32xf32> to vector<2x32xbf16>
    %c0_4 = arith.constant 0 : index
    %c0_5 = arith.constant 0 : index
    %c0_6 = arith.constant 0 : index
    %6 = vector.load %arg2[%c0_4, %c0_5, %c0_6] : memref<3x32x32xbf16, #tpu.memory_space<vmem>>, vector<1x32x32xbf16>
    %7 = vector.shape_cast %6 : vector<1x32x32xbf16> to vector<32x32xbf16>
    %cst_7 = arith.constant dense<0.000000e+00> : vector<2x32xf32>
    %8 = tpu.matmul %5, %7, %cst_7 {dimension_numbers = #tpu.dot_dimension_numbers<[1], [0], [0], [1], [0, 0, 1, 1], [], []>} : vector<2x32xbf16>, vector<32x32xbf16>, vector<2x32xf32> -> vector<2x32xf32>
    %c1 = arith.constant 1 : index
    %c0_8 = arith.constant 0 : index
    %c0_9 = arith.constant 0 : index
    %9 = vector.load %arg2[%c1, %c0_8, %c0_9] : memref<3x32x32xbf16, #tpu.memory_space<vmem>>, vector<1x32x32xbf16>
    %10 = vector.shape_cast %9 : vector<1x32x32xbf16> to vector<32x32xbf16>
    %cst_10 = arith.constant dense<0.000000e+00> : vector<2x32xf32>
    %11 = tpu.matmul %5, %10, %cst_10 {dimension_numbers = #tpu.dot_dimension_numbers<[1], [0], [0], [1], [0, 0, 1, 1], [], []>} : vector<2x32xbf16>, vector<32x32xbf16>, vector<2x32xf32> -> vector<2x32xf32>
    %c2 = arith.constant 2 : index
    %c0_11 = arith.constant 0 : index
    %c0_12 = arith.constant 0 : index
    %12 = vector.load %arg2[%c2, %c0_11, %c0_12] : memref<3x32x32xbf16, #tpu.memory_space<vmem>>, vector<1x32x32xbf16>
    %13 = vector.shape_cast %12 : vector<1x32x32xbf16> to vector<32x32xbf16>
    %cst_13 = arith.constant dense<0.000000e+00> : vector<2x32xf32>
    %14 = tpu.matmul %5, %13, %cst_13 {dimension_numbers = #tpu.dot_dimension_numbers<[1], [0], [0], [1], [0, 0, 1, 1], [], []>} : vector<2x32xbf16>, vector<32x32xbf16>, vector<2x32xf32> -> vector<2x32xf32>
    %15 = vector.extract_strided_slice %4 {offsets = [0, 0, 0], sizes = [1, 2, 32], strides = [1, 1, 1]} : vector<3x2x32xf32> to vector<1x2x32xf32>
    %16 = vector.shape_cast %15 : vector<1x2x32xf32> to vector<2x32xf32>
    %17 = arith.addf %16, %8 : vector<2x32xf32>
    %18 = arith.negf %17 : vector<2x32xf32>
    %19 = math.exp %18 : vector<2x32xf32>
    %cst_14 = arith.constant 1.000000e+00 : f32
    %20 = vector.broadcast %cst_14 : f32 to vector<2x32xf32>
    %21 = arith.addf %20, %19 : vector<2x32xf32>
    %22 = arith.divf %20, %21 : vector<2x32xf32>
    %23 = vector.extract_strided_slice %4 {offsets = [1, 0, 0], sizes = [1, 2, 32], strides = [1, 1, 1]} : vector<3x2x32xf32> to vector<1x2x32xf32>
    %24 = vector.shape_cast %23 : vector<1x2x32xf32> to vector<2x32xf32>
    %25 = arith.addf %24, %11 : vector<2x32xf32>
    %26 = arith.negf %25 : vector<2x32xf32>
    %27 = math.exp %26 : vector<2x32xf32>
    %cst_15 = arith.constant 1.000000e+00 : f32
    %28 = vector.broadcast %cst_15 : f32 to vector<2x32xf32>
    %29 = arith.addf %28, %27 : vector<2x32xf32>
    %30 = arith.divf %28, %29 : vector<2x32xf32>
    %31 = vector.extract_strided_slice %4 {offsets = [2, 0, 0], sizes = [1, 2, 32], strides = [1, 1, 1]} : vector<3x2x32xf32> to vector<1x2x32xf32>
    %32 = vector.shape_cast %31 : vector<1x2x32xf32> to vector<2x32xf32>
    %33 = vector.broadcast %0 : vector<1x32xf32> to vector<2x32xf32>
    %34 = arith.addf %14, %33 : vector<2x32xf32>
    %35 = arith.mulf %22, %34 : vector<2x32xf32>
    %36 = arith.addf %32, %35 : vector<2x32xf32>
    %37 = math.tanh %36 : vector<2x32xf32>
    %38 = arith.subf %1, %37 : vector<2x32xf32>
    %39 = arith.mulf %30, %38 : vector<2x32xf32>
    %40 = arith.addf %37, %39 : vector<2x32xf32>
    %41 = arith.index_cast %c0_i32 : i32 to index
    %c0_16 = arith.constant 0 : index
    %c0_17 = arith.constant 0 : index
    %42 = vector.load %arg4[%41, %c0_16, %c0_17] : memref<8x2x32xf32, #tpu.memory_space<vmem>>, vector<1x2x32xf32>
    %43 = vector.shape_cast %42 : vector<1x2x32xf32> to vector<2x32xf32>
    %44 = vector.shape_cast %40 : vector<2x32xf32> to vector<1x2x32xf32>
    tpu.vector_store %arg4[%41, %c0_16, %c0_17], %44 {strides = array<i32>} : memref<8x2x32xf32, #tpu.memory_space<vmem>>, vector<1x2x32xf32>,
    %c1_i32 = arith.constant 1 : i32
    %45 = arith.index_cast %c1_i32 : i32 to index
    %c0_18 = arith.constant 0 : index
    %c0_19 = arith.constant 0 : index
    %c0_20 = arith.constant 0 : index
    %46 = vector.load %arg1[%45, %c0_18, %c0_19, %c0_20] : memref<8x3x2x32xf32, #tpu.memory_space<vmem>>, vector<1x3x2x32xf32>
    %47 = vector.shape_cast %46 : vector<1x3x2x32xf32> to vector<3x2x32xf32>
    %48 = arith.truncf %40 : vector<2x32xf32> to vector<2x32xbf16>
    %c0_21 = arith.constant 0 : index
    %c0_22 = arith.constant 0 : index
    %c0_23 = arith.constant 0 : index
    %49 = vector.load %arg2[%c0_21, %c0_22, %c0_23] : memref<3x32x32xbf16, #tpu.memory_space<vmem>>, vector<1x32x32xbf16>
    %50 = vector.shape_cast %49 : vector<1x32x32xbf16> to vector<32x32xbf16>
    %cst_24 = arith.constant dense<0.000000e+00> : vector<2x32xf32>
    %51 = tpu.matmul %48, %50, %cst_24 {dimension_numbers = #tpu.dot_dimension_numbers<[1], [0], [0], [1], [0, 0, 1, 1], [], []>} : vector<2x32xbf16>, vector<32x32xbf16>, vector<2x32xf32> -> vector<2x32xf32>
    %c1_25 = arith.constant 1 : index
    %c0_26 = arith.constant 0 : index
    %c0_27 = arith.constant 0 : index
    %52 = vector.load %arg2[%c1_25, %c0_26, %c0_27] : memref<3x32x32xbf16, #tpu.memory_space<vmem>>, vector<1x32x32xbf16>
    %53 = vector.shape_cast %52 : vector<1x32x32xbf16> to vector<32x32xbf16>
    %cst_28 = arith.constant dense<0.000000e+00> : vector<2x32xf32>
    %54 = tpu.matmul %48, %53, %cst_28 {dimension_numbers = #tpu.dot_dimension_numbers<[1], [0], [0], [1], [0, 0, 1, 1], [], []>} : vector<2x32xbf16>, vector<32x32xbf16>, vector<2x32xf32> -> vector<2x32xf32>
    %c2_29 = arith.constant 2 : index
    %c0_30 = arith.constant 0 : index
    %c0_31 = arith.constant 0 : index
    %55 = vector.load %arg2[%c2_29, %c0_30, %c0_31] : memref<3x32x32xbf16, #tpu.memory_space<vmem>>, vector<1x32x32xbf16>
    %56 = vector.shape_cast %55 : vector<1x32x32xbf16> to vector<32x32xbf16>
    %cst_32 = arith.constant dense<0.000000e+00> : vector<2x32xf32>
    %57 = tpu.matmul %48, %56, %cst_32 {dimension_numbers = #tpu.dot_dimension_numbers<[1], [0], [0], [1], [0, 0, 1, 1], [], []>} : vector<2x32xbf16>, vector<32x32xbf16>, vector<2x32xf32> -> vector<2x32xf32>
    %58 = vector.extract_strided_slice %47 {offsets = [0, 0, 0], sizes = [1, 2, 32], strides = [1, 1, 1]} : vector<3x2x32xf32> to vector<1x2x32xf32>
    %59 = vector.shape_cast %58 : vector<1x2x32xf32> to vector<2x32xf32>
    %60 = arith.addf %59, %51 : vector<2x32xf32>
    %61 = arith.negf %60 : vector<2x32xf32>
    %62 = math.exp %61 : vector<2x32xf32>
    %cst_33 = arith.constant 1.000000e+00 : f32
    %63 = vector.broadcast %cst_33 : f32 to vector<2x32xf32>
    %64 = arith.addf %63, %62 : vector<2x32xf32>
    %65 = arith.divf %63, %64 : vector<2x32xf32>
    %66 = vector.extract_strided_slice %47 {offsets = [1, 0, 0], sizes = [1, 2, 32], strides = [1, 1, 1]} : vector<3x2x32xf32> to vector<1x2x32xf32>
    %67 = vector.shape_cast %66 : vector<1x2x32xf32> to vector<2x32xf32>
    %68 = arith.addf %67, %54 : vector<2x32xf32>
    %69 = arith.negf %68 : vector<2x32xf32>
    %70 = math.exp %69 : vector<2x32xf32>
    %cst_34 = arith.constant 1.000000e+00 : f32
    %71 = vector.broadcast %cst_34 : f32 to vector<2x32xf32>
    %72 = arith.addf %71, %70 : vector<2x32xf32>
    %73 = arith.divf %71, %72 : vector<2x32xf32>
    %74 = vector.extract_strided_slice %47 {offsets = [2, 0, 0], sizes = [1, 2, 32], strides = [1, 1, 1]} : vector<3x2x32xf32> to vector<1x2x32xf32>
    %75 = vector.shape_cast %74 : vector<1x2x32xf32> to vector<2x32xf32>
    %76 = vector.broadcast %0 : vector<1x32xf32> to vector<2x32xf32>
    %77 = arith.addf %57, %76 : vector<2x32xf32>
    %78 = arith.mulf %65, %77 : vector<2x32xf32>
    %79 = arith.addf %75, %78 : vector<2x32xf32>
    %80 = math.tanh %79 : vector<2x32xf32>
    %81 = arith.subf %40, %80 : vector<2x32xf32>
    %82 = arith.mulf %73, %81 : vector<2x32xf32>
    %83 = arith.addf %80, %82 : vector<2x32xf32>
    %84 = arith.index_cast %c1_i32 : i32 to index
    %c0_35 = arith.constant 0 : index
    %c0_36 = arith.constant 0 : index
    %85 = vector.load %arg4[%84, %c0_35, %c0_36] : memref<8x2x32xf32, #tpu.memory_space<vmem>>, vector<1x2x32xf32>
    %86 = vector.shape_cast %85 : vector<1x2x32xf32> to vector<2x32xf32>
    %87 = vector.shape_cast %83 : vector<2x32xf32> to vector<1x2x32xf32>
    tpu.vector_store %arg4[%84, %c0_35, %c0_36], %87 {strides = array<i32>} : memref<8x2x32xf32, #tpu.memory_space<vmem>>, vector<1x2x32xf32>,
    %c2_i32 = arith.constant 2 : i32
    %88 = arith.index_cast %c2_i32 : i32 to index
    %c0_37 = arith.constant 0 : index
    %c0_38 = arith.constant 0 : index
    %c0_39 = arith.constant 0 : index
    %89 = vector.load %arg1[%88, %c0_37, %c0_38, %c0_39] : memref<8x3x2x32xf32, #tpu.memory_space<vmem>>, vector<1x3x2x32xf32>
    %90 = vector.shape_cast %89 : vector<1x3x2x32xf32> to vector<3x2x32xf32>
    %91 = arith.truncf %83 : vector<2x32xf32> to vector<2x32xbf16>
    %c0_40 = arith.constant 0 : index
    %c0_41 = arith.constant 0 : index
    %c0_42 = arith.constant 0 : index
    %92 = vector.load %arg2[%c0_40, %c0_41, %c0_42] : memref<3x32x32xbf16, #tpu.memory_space<vmem>>, vector<1x32x32xbf16>
    %93 = vector.shape_cast %92 : vector<1x32x32xbf16> to vector<32x32xbf16>
    %cst_43 = arith.constant dense<0.000000e+00> : vector<2x32xf32>
    %94 = tpu.matmul %91, %93, %cst_43 {dimension_numbers = #tpu.dot_dimension_numbers<[1], [0], [0], [1], [0, 0, 1, 1], [], []>} : vector<2x32xbf16>, vector<32x32xbf16>, vector<2x32xf32> -> vector<2x32xf32>
    %c1_44 = arith.constant 1 : index
    %c0_45 = arith.constant 0 : index
    %c0_46 = arith.constant 0 : index
    %95 = vector.load %arg2[%c1_44, %c0_45, %c0_46] : memref<3x32x32xbf16, #tpu.memory_space<vmem>>, vector<1x32x32xbf16>
    %96 = vector.shape_cast %95 : vector<1x32x32xbf16> to vector<32x32xbf16>
    %cst_47 = arith.constant dense<0.000000e+00> : vector<2x32xf32>
    %97 = tpu.matmul %91, %96, %cst_47 {dimension_numbers = #tpu.dot_dimension_numbers<[1], [0], [0], [1], [0, 0, 1, 1], [], []>} : vector<2x32xbf16>, vector<32x32xbf16>, vector<2x32xf32> -> vector<2x32xf32>
    %c2_48 = arith.constant 2 : index
    %c0_49 = arith.constant 0 : index
    %c0_50 = arith.constant 0 : index
    %98 = vector.load %arg2[%c2_48, %c0_49, %c0_50] : memref<3x32x32xbf16, #tpu.memory_space<vmem>>, vector<1x32x32xbf16>
    %99 = vector.shape_cast %98 : vector<1x32x32xbf16> to vector<32x32xbf16>
    %cst_51 = arith.constant dense<0.000000e+00> : vector<2x32xf32>
    %100 = tpu.matmul %91, %99, %cst_51 {dimension_numbers = #tpu.dot_dimension_numbers<[1], [0], [0], [1], [0, 0, 1, 1], [], []>} : vector<2x32xbf16>, vector<32x32xbf16>, vector<2x32xf32> -> vector<2x32xf32>
    %101 = vector.extract_strided_slice %90 {offsets = [0, 0, 0], sizes = [1, 2, 32], strides = [1, 1, 1]} : vector<3x2x32xf32> to vector<1x2x32xf32>
    %102 = vector.shape_cast %101 : vector<1x2x32xf32> to vector<2x32xf32>
    %103 = arith.addf %102, %94 : vector<2x32xf32>
    %104 = arith.negf %103 : vector<2x32xf32>
    %105 = math.exp %104 : vector<2x32xf32>
    %cst_52 = arith.constant 1.000000e+00 : f32
    %106 = vector.broadcast %cst_52 : f32 to vector<2x32xf32>
    %107 = arith.addf %106, %105 : vector<2x32xf32>
    %108 = arith.divf %106, %107 : vector<2x32xf32>
    %109 = vector.extract_strided_slice %90 {offsets = [1, 0, 0], sizes = [1, 2, 32], strides = [1, 1, 1]} : vector<3x2x32xf32> to vector<1x2x32xf32>
    %110 = vector.shape_cast %109 : vector<1x2x32xf32> to vector<2x32xf32>
    %111 = arith.addf %110, %97 : vector<2x32xf32>
    %112 = arith.negf %111 : vector<2x32xf32>
    %113 = math.exp %112 : vector<2x32xf32>
    %cst_53 = arith.constant 1.000000e+00 : f32
    %114 = vector.broadcast %cst_53 : f32 to vector<2x32xf32>
    %115 = arith.addf %114, %113 : vector<2x32xf32>
    %116 = arith.divf %114, %115 : vector<2x32xf32>
    %117 = vector.extract_strided_slice %90 {offsets = [2, 0, 0], sizes = [1, 2, 32], strides = [1, 1, 1]} : vector<3x2x32xf32> to vector<1x2x32xf32>
    %118 = vector.shape_cast %117 : vector<1x2x32xf32> to vector<2x32xf32>
    %119 = vector.broadcast %0 : vector<1x32xf32> to vector<2x32xf32>
    %120 = arith.addf %100, %119 : vector<2x32xf32>
    %121 = arith.mulf %108, %120 : vector<2x32xf32>
    %122 = arith.addf %118, %121 : vector<2x32xf32>
    %123 = math.tanh %122 : vector<2x32xf32>
    %124 = arith.subf %83, %123 : vector<2x32xf32>
    %125 = arith.mulf %116, %124 : vector<2x32xf32>
    %126 = arith.addf %123, %125 : vector<2x32xf32>
    %127 = arith.index_cast %c2_i32 : i32 to index
    %c0_54 = arith.constant 0 : index
    %c0_55 = arith.constant 0 : index
    %128 = vector.load %arg4[%127, %c0_54, %c0_55] : memref<8x2x32xf32, #tpu.memory_space<vmem>>, vector<1x2x32xf32>
    %129 = vector.shape_cast %128 : vector<1x2x32xf32> to vector<2x32xf32>
    %130 = vector.shape_cast %126 : vector<2x32xf32> to vector<1x2x32xf32>
    tpu.vector_store %arg4[%127, %c0_54, %c0_55], %130 {strides = array<i32>} : memref<8x2x32xf32, #tpu.memory_space<vmem>>, vector<1x2x32xf32>,
    %c3_i32 = arith.constant 3 : i32
    %131 = arith.index_cast %c3_i32 : i32 to index
    %c0_56 = arith.constant 0 : index
    %c0_57 = arith.constant 0 : index
    %c0_58 = arith.constant 0 : index
    %132 = vector.load %arg1[%131, %c0_56, %c0_57, %c0_58] : memref<8x3x2x32xf32, #tpu.memory_space<vmem>>, vector<1x3x2x32xf32>
    %133 = vector.shape_cast %132 : vector<1x3x2x32xf32> to vector<3x2x32xf32>
    %134 = arith.truncf %126 : vector<2x32xf32> to vector<2x32xbf16>
    %c0_59 = arith.constant 0 : index
    %c0_60 = arith.constant 0 : index
    %c0_61 = arith.constant 0 : index
    %135 = vector.load %arg2[%c0_59, %c0_60, %c0_61] : memref<3x32x32xbf16, #tpu.memory_space<vmem>>, vector<1x32x32xbf16>
    %136 = vector.shape_cast %135 : vector<1x32x32xbf16> to vector<32x32xbf16>
    %cst_62 = arith.constant dense<0.000000e+00> : vector<2x32xf32>
    %137 = tpu.matmul %134, %136, %cst_62 {dimension_numbers = #tpu.dot_dimension_numbers<[1], [0], [0], [1], [0, 0, 1, 1], [], []>} : vector<2x32xbf16>, vector<32x32xbf16>, vector<2x32xf32> -> vector<2x32xf32>
    %c1_63 = arith.constant 1 : index
    %c0_64 = arith.constant 0 : index
    %c0_65 = arith.constant 0 : index
    %138 = vector.load %arg2[%c1_63, %c0_64, %c0_65] : memref<3x32x32xbf16, #tpu.memory_space<vmem>>, vector<1x32x32xbf16>
    %139 = vector.shape_cast %138 : vector<1x32x32xbf16> to vector<32x32xbf16>
    %cst_66 = arith.constant dense<0.000000e+00> : vector<2x32xf32>
    %140 = tpu.matmul %134, %139, %cst_66 {dimension_numbers = #tpu.dot_dimension_numbers<[1], [0], [0], [1], [0, 0, 1, 1], [], []>} : vector<2x32xbf16>, vector<32x32xbf16>, vector<2x32xf32> -> vector<2x32xf32>
    %c2_67 = arith.constant 2 : index
    %c0_68 = arith.constant 0 : index
    %c0_69 = arith.constant 0 : index
    %141 = vector.load %arg2[%c2_67, %c0_68, %c0_69] : memref<3x32x32xbf16, #tpu.memory_space<vmem>>, vector<1x32x32xbf16>
    %142 = vector.shape_cast %141 : vector<1x32x32xbf16> to vector<32x32xbf16>
    %cst_70 = arith.constant dense<0.000000e+00> : vector<2x32xf32>
    %143 = tpu.matmul %134, %142, %cst_70 {dimension_numbers = #tpu.dot_dimension_numbers<[1], [0], [0], [1], [0, 0, 1, 1], [], []>} : vector<2x32xbf16>, vector<32x32xbf16>, vector<2x32xf32> -> vector<2x32xf32>
    %144 = vector.extract_strided_slice %133 {offsets = [0, 0, 0], sizes = [1, 2, 32], strides = [1, 1, 1]} : vector<3x2x32xf32> to vector<1x2x32xf32>
    %145 = vector.shape_cast %144 : vector<1x2x32xf32> to vector<2x32xf32>
    %146 = arith.addf %145, %137 : vector<2x32xf32>
    %147 = arith.negf %146 : vector<2x32xf32>
    %148 = math.exp %147 : vector<2x32xf32>
    %cst_71 = arith.constant 1.000000e+00 : f32
    %149 = vector.broadcast %cst_71 : f32 to vector<2x32xf32>
    %150 = arith.addf %149, %148 : vector<2x32xf32>
    %151 = arith.divf %149, %150 : vector<2x32xf32>
    %152 = vector.extract_strided_slice %133 {offsets = [1, 0, 0], sizes = [1, 2, 32], strides = [1, 1, 1]} : vector<3x2x32xf32> to vector<1x2x32xf32>
    %153 = vector.shape_cast %152 : vector<1x2x32xf32> to vector<2x32xf32>
    %154 = arith.addf %153, %140 : vector<2x32xf32>
    %155 = arith.negf %154 : vector<2x32xf32>
    %156 = math.exp %155 : vector<2x32xf32>
    %cst_72 = arith.constant 1.000000e+00 : f32
    %157 = vector.broadcast %cst_72 : f32 to vector<2x32xf32>
    %158 = arith.addf %157, %156 : vector<2x32xf32>
    %159 = arith.divf %157, %158 : vector<2x32xf32>
    %160 = vector.extract_strided_slice %133 {offsets = [2, 0, 0], sizes = [1, 2, 32], strides = [1, 1, 1]} : vector<3x2x32xf32> to vector<1x2x32xf32>
    %161 = vector.shape_cast %160 : vector<1x2x32xf32> to vector<2x32xf32>
    %162 = vector.broadcast %0 : vector<1x32xf32> to vector<2x32xf32>
    %163 = arith.addf %143, %162 : vector<2x32xf32>
    %164 = arith.mulf %151, %163 : vector<2x32xf32>
    %165 = arith.addf %161, %164 : vector<2x32xf32>
    %166 = math.tanh %165 : vector<2x32xf32>
    %167 = arith.subf %126, %166 : vector<2x32xf32>
    %168 = arith.mulf %159, %167 : vector<2x32xf32>
    %169 = arith.addf %166, %168 : vector<2x32xf32>
    %170 = arith.index_cast %c3_i32 : i32 to index
    %c0_73 = arith.constant 0 : index
    %c0_74 = arith.constant 0 : index
    %171 = vector.load %arg4[%170, %c0_73, %c0_74] : memref<8x2x32xf32, #tpu.memory_space<vmem>>, vector<1x2x32xf32>
    %172 = vector.shape_cast %171 : vector<1x2x32xf32> to vector<2x32xf32>
    %173 = vector.shape_cast %169 : vector<2x32xf32> to vector<1x2x32xf32>
    tpu.vector_store %arg4[%170, %c0_73, %c0_74], %173 {strides = array<i32>} : memref<8x2x32xf32, #tpu.memory_space<vmem>>, vector<1x2x32xf32>,
    %c4_i32 = arith.constant 4 : i32
    %174 = arith.index_cast %c4_i32 : i32 to index
    %c0_75 = arith.constant 0 : index
    %c0_76 = arith.constant 0 : index
    %c0_77 = arith.constant 0 : index
    %175 = vector.load %arg1[%174, %c0_75, %c0_76, %c0_77] : memref<8x3x2x32xf32, #tpu.memory_space<vmem>>, vector<1x3x2x32xf32>
    %176 = vector.shape_cast %175 : vector<1x3x2x32xf32> to vector<3x2x32xf32>
    %177 = arith.truncf %169 : vector<2x32xf32> to vector<2x32xbf16>
    %c0_78 = arith.constant 0 : index
    %c0_79 = arith.constant 0 : index
    %c0_80 = arith.constant 0 : index
    %178 = vector.load %arg2[%c0_78, %c0_79, %c0_80] : memref<3x32x32xbf16, #tpu.memory_space<vmem>>, vector<1x32x32xbf16>
    %179 = vector.shape_cast %178 : vector<1x32x32xbf16> to vector<32x32xbf16>
    %cst_81 = arith.constant dense<0.000000e+00> : vector<2x32xf32>
    %180 = tpu.matmul %177, %179, %cst_81 {dimension_numbers = #tpu.dot_dimension_numbers<[1], [0], [0], [1], [0, 0, 1, 1], [], []>} : vector<2x32xbf16>, vector<32x32xbf16>, vector<2x32xf32> -> vector<2x32xf32>
    %c1_82 = arith.constant 1 : index
    %c0_83 = arith.constant 0 : index
    %c0_84 = arith.constant 0 : index
    %181 = vector.load %arg2[%c1_82, %c0_83, %c0_84] : memref<3x32x32xbf16, #tpu.memory_space<vmem>>, vector<1x32x32xbf16>
    %182 = vector.shape_cast %181 : vector<1x32x32xbf16> to vector<32x32xbf16>
    %cst_85 = arith.constant dense<0.000000e+00> : vector<2x32xf32>
    %183 = tpu.matmul %177, %182, %cst_85 {dimension_numbers = #tpu.dot_dimension_numbers<[1], [0], [0], [1], [0, 0, 1, 1], [], []>} : vector<2x32xbf16>, vector<32x32xbf16>, vector<2x32xf32> -> vector<2x32xf32>
    %c2_86 = arith.constant 2 : index
    %c0_87 = arith.constant 0 : index
    %c0_88 = arith.constant 0 : index
    %184 = vector.load %arg2[%c2_86, %c0_87, %c0_88] : memref<3x32x32xbf16, #tpu.memory_space<vmem>>, vector<1x32x32xbf16>
    %185 = vector.shape_cast %184 : vector<1x32x32xbf16> to vector<32x32xbf16>
    %cst_89 = arith.constant dense<0.000000e+00> : vector<2x32xf32>
    %186 = tpu.matmul %177, %185, %cst_89 {dimension_numbers = #tpu.dot_dimension_numbers<[1], [0], [0], [1], [0, 0, 1, 1], [], []>} : vector<2x32xbf16>, vector<32x32xbf16>, vector<2x32xf32> -> vector<2x32xf32>
    %187 = vector.extract_strided_slice %176 {offsets = [0, 0, 0], sizes = [1, 2, 32], strides = [1, 1, 1]} : vector<3x2x32xf32> to vector<1x2x32xf32>
    %188 = vector.shape_cast %187 : vector<1x2x32xf32> to vector<2x32xf32>
    %189 = arith.addf %188, %180 : vector<2x32xf32>
    %190 = arith.negf %189 : vector<2x32xf32>
    %191 = math.exp %190 : vector<2x32xf32>
    %cst_90 = arith.constant 1.000000e+00 : f32
    %192 = vector.broadcast %cst_90 : f32 to vector<2x32xf32>
    %193 = arith.addf %192, %191 : vector<2x32xf32>
    %194 = arith.divf %192, %193 : vector<2x32xf32>
    %195 = vector.extract_strided_slice %176 {offsets = [1, 0, 0], sizes = [1, 2, 32], strides = [1, 1, 1]} : vector<3x2x32xf32> to vector<1x2x32xf32>
    %196 = vector.shape_cast %195 : vector<1x2x32xf32> to vector<2x32xf32>
    %197 = arith.addf %196, %183 : vector<2x32xf32>
    %198 = arith.negf %197 : vector<2x32xf32>
    %199 = math.exp %198 : vector<2x32xf32>
    %cst_91 = arith.constant 1.000000e+00 : f32
    %200 = vector.broadcast %cst_91 : f32 to vector<2x32xf32>
    %201 = arith.addf %200, %199 : vector<2x32xf32>
    %202 = arith.divf %200, %201 : vector<2x32xf32>
    %203 = vector.extract_strided_slice %176 {offsets = [2, 0, 0], sizes = [1, 2, 32], strides = [1, 1, 1]} : vector<3x2x32xf32> to vector<1x2x32xf32>
    %204 = vector.shape_cast %203 : vector<1x2x32xf32> to vector<2x32xf32>
    %205 = vector.broadcast %0 : vector<1x32xf32> to vector<2x32xf32>
    %206 = arith.addf %186, %205 : vector<2x32xf32>
    %207 = arith.mulf %194, %206 : vector<2x32xf32>
    %208 = arith.addf %204, %207 : vector<2x32xf32>
    %209 = math.tanh %208 : vector<2x32xf32>
    %210 = arith.subf %169, %209 : vector<2x32xf32>
    %211 = arith.mulf %202, %210 : vector<2x32xf32>
    %212 = arith.addf %209, %211 : vector<2x32xf32>
    %213 = arith.index_cast %c4_i32 : i32 to index
    %c0_92 = arith.constant 0 : index
    %c0_93 = arith.constant 0 : index
    %214 = vector.load %arg4[%213, %c0_92, %c0_93] : memref<8x2x32xf32, #tpu.memory_space<vmem>>, vector<1x2x32xf32>
    %215 = vector.shape_cast %214 : vector<1x2x32xf32> to vector<2x32xf32>
    %216 = vector.shape_cast %212 : vector<2x32xf32> to vector<1x2x32xf32>
    tpu.vector_store %arg4[%213, %c0_92, %c0_93], %216 {strides = array<i32>} : memref<8x2x32xf32, #tpu.memory_space<vmem>>, vector<1x2x32xf32>,
    %c5_i32 = arith.constant 5 : i32
    %217 = arith.index_cast %c5_i32 : i32 to index
    %c0_94 = arith.constant 0 : index
    %c0_95 = arith.constant 0 : index
    %c0_96 = arith.constant 0 : index
    %218 = vector.load %arg1[%217, %c0_94, %c0_95, %c0_96] : memref<8x3x2x32xf32, #tpu.memory_space<vmem>>, vector<1x3x2x32xf32>
    %219 = vector.shape_cast %218 : vector<1x3x2x32xf32> to vector<3x2x32xf32>
    %220 = arith.truncf %212 : vector<2x32xf32> to vector<2x32xbf16>
    %c0_97 = arith.constant 0 : index
    %c0_98 = arith.constant 0 : index
    %c0_99 = arith.constant 0 : index
    %221 = vector.load %arg2[%c0_97, %c0_98, %c0_99] : memref<3x32x32xbf16, #tpu.memory_space<vmem>>, vector<1x32x32xbf16>
    %222 = vector.shape_cast %221 : vector<1x32x32xbf16> to vector<32x32xbf16>
    %cst_100 = arith.constant dense<0.000000e+00> : vector<2x32xf32>
    %223 = tpu.matmul %220, %222, %cst_100 {dimension_numbers = #tpu.dot_dimension_numbers<[1], [0], [0], [1], [0, 0, 1, 1], [], []>} : vector<2x32xbf16>, vector<32x32xbf16>, vector<2x32xf32> -> vector<2x32xf32>
    %c1_101 = arith.constant 1 : index
    %c0_102 = arith.constant 0 : index
    %c0_103 = arith.constant 0 : index
    %224 = vector.load %arg2[%c1_101, %c0_102, %c0_103] : memref<3x32x32xbf16, #tpu.memory_space<vmem>>, vector<1x32x32xbf16>
    %225 = vector.shape_cast %224 : vector<1x32x32xbf16> to vector<32x32xbf16>
    %cst_104 = arith.constant dense<0.000000e+00> : vector<2x32xf32>
    %226 = tpu.matmul %220, %225, %cst_104 {dimension_numbers = #tpu.dot_dimension_numbers<[1], [0], [0], [1], [0, 0, 1, 1], [], []>} : vector<2x32xbf16>, vector<32x32xbf16>, vector<2x32xf32> -> vector<2x32xf32>
    %c2_105 = arith.constant 2 : index
    %c0_106 = arith.constant 0 : index
    %c0_107 = arith.constant 0 : index
    %227 = vector.load %arg2[%c2_105, %c0_106, %c0_107] : memref<3x32x32xbf16, #tpu.memory_space<vmem>>, vector<1x32x32xbf16>
    %228 = vector.shape_cast %227 : vector<1x32x32xbf16> to vector<32x32xbf16>
    %cst_108 = arith.constant dense<0.000000e+00> : vector<2x32xf32>
    %229 = tpu.matmul %220, %228, %cst_108 {dimension_numbers = #tpu.dot_dimension_numbers<[1], [0], [0], [1], [0, 0, 1, 1], [], []>} : vector<2x32xbf16>, vector<32x32xbf16>, vector<2x32xf32> -> vector<2x32xf32>
    %230 = vector.extract_strided_slice %219 {offsets = [0, 0, 0], sizes = [1, 2, 32], strides = [1, 1, 1]} : vector<3x2x32xf32> to vector<1x2x32xf32>
    %231 = vector.shape_cast %230 : vector<1x2x32xf32> to vector<2x32xf32>
    %232 = arith.addf %231, %223 : vector<2x32xf32>
    %233 = arith.negf %232 : vector<2x32xf32>
    %234 = math.exp %233 : vector<2x32xf32>
    %cst_109 = arith.constant 1.000000e+00 : f32
    %235 = vector.broadcast %cst_109 : f32 to vector<2x32xf32>
    %236 = arith.addf %235, %234 : vector<2x32xf32>
    %237 = arith.divf %235, %236 : vector<2x32xf32>
    %238 = vector.extract_strided_slice %219 {offsets = [1, 0, 0], sizes = [1, 2, 32], strides = [1, 1, 1]} : vector<3x2x32xf32> to vector<1x2x32xf32>
    %239 = vector.shape_cast %238 : vector<1x2x32xf32> to vector<2x32xf32>
    %240 = arith.addf %239, %226 : vector<2x32xf32>
    %241 = arith.negf %240 : vector<2x32xf32>
    %242 = math.exp %241 : vector<2x32xf32>
    %cst_110 = arith.constant 1.000000e+00 : f32
    %243 = vector.broadcast %cst_110 : f32 to vector<2x32xf32>
    %244 = arith.addf %243, %242 : vector<2x32xf32>
    %245 = arith.divf %243, %244 : vector<2x32xf32>
    %246 = vector.extract_strided_slice %219 {offsets = [2, 0, 0], sizes = [1, 2, 32], strides = [1, 1, 1]} : vector<3x2x32xf32> to vector<1x2x32xf32>
    %247 = vector.shape_cast %246 : vector<1x2x32xf32> to vector<2x32xf32>
    %248 = vector.broadcast %0 : vector<1x32xf32> to vector<2x32xf32>
    %249 = arith.addf %229, %248 : vector<2x32xf32>
    %250 = arith.mulf %237, %249 : vector<2x32xf32>
    %251 = arith.addf %247, %250 : vector<2x32xf32>
    %252 = math.tanh %251 : vector<2x32xf32>
    %253 = arith.subf %212, %252 : vector<2x32xf32>
    %254 = arith.mulf %245, %253 : vector<2x32xf32>
    %255 = arith.addf %252, %254 : vector<2x32xf32>
    %256 = arith.index_cast %c5_i32 : i32 to index
    %c0_111 = arith.constant 0 : index
    %c0_112 = arith.constant 0 : index
    %257 = vector.load %arg4[%256, %c0_111, %c0_112] : memref<8x2x32xf32, #tpu.memory_space<vmem>>, vector<1x2x32xf32>
    %258 = vector.shape_cast %257 : vector<1x2x32xf32> to vector<2x32xf32>
    %259 = vector.shape_cast %255 : vector<2x32xf32> to vector<1x2x32xf32>
    tpu.vector_store %arg4[%256, %c0_111, %c0_112], %259 {strides = array<i32>} : memref<8x2x32xf32, #tpu.memory_space<vmem>>, vector<1x2x32xf32>,
    %c6_i32 = arith.constant 6 : i32
    %260 = arith.index_cast %c6_i32 : i32 to index
    %c0_113 = arith.constant 0 : index
    %c0_114 = arith.constant 0 : index
    %c0_115 = arith.constant 0 : index
    %261 = vector.load %arg1[%260, %c0_113, %c0_114, %c0_115] : memref<8x3x2x32xf32, #tpu.memory_space<vmem>>, vector<1x3x2x32xf32>
    %262 = vector.shape_cast %261 : vector<1x3x2x32xf32> to vector<3x2x32xf32>
    %263 = arith.truncf %255 : vector<2x32xf32> to vector<2x32xbf16>
    %c0_116 = arith.constant 0 : index
    %c0_117 = arith.constant 0 : index
    %c0_118 = arith.constant 0 : index
    %264 = vector.load %arg2[%c0_116, %c0_117, %c0_118] : memref<3x32x32xbf16, #tpu.memory_space<vmem>>, vector<1x32x32xbf16>
    %265 = vector.shape_cast %264 : vector<1x32x32xbf16> to vector<32x32xbf16>
    %cst_119 = arith.constant dense<0.000000e+00> : vector<2x32xf32>
    %266 = tpu.matmul %263, %265, %cst_119 {dimension_numbers = #tpu.dot_dimension_numbers<[1], [0], [0], [1], [0, 0, 1, 1], [], []>} : vector<2x32xbf16>, vector<32x32xbf16>, vector<2x32xf32> -> vector<2x32xf32>
    %c1_120 = arith.constant 1 : index
    %c0_121 = arith.constant 0 : index
    %c0_122 = arith.constant 0 : index
    %267 = vector.load %arg2[%c1_120, %c0_121, %c0_122] : memref<3x32x32xbf16, #tpu.memory_space<vmem>>, vector<1x32x32xbf16>
    %268 = vector.shape_cast %267 : vector<1x32x32xbf16> to vector<32x32xbf16>
    %cst_123 = arith.constant dense<0.000000e+00> : vector<2x32xf32>
    %269 = tpu.matmul %263, %268, %cst_123 {dimension_numbers = #tpu.dot_dimension_numbers<[1], [0], [0], [1], [0, 0, 1, 1], [], []>} : vector<2x32xbf16>, vector<32x32xbf16>, vector<2x32xf32> -> vector<2x32xf32>
    %c2_124 = arith.constant 2 : index
    %c0_125 = arith.constant 0 : index
    %c0_126 = arith.constant 0 : index
    %270 = vector.load %arg2[%c2_124, %c0_125, %c0_126] : memref<3x32x32xbf16, #tpu.memory_space<vmem>>, vector<1x32x32xbf16>
    %271 = vector.shape_cast %270 : vector<1x32x32xbf16> to vector<32x32xbf16>
    %cst_127 = arith.constant dense<0.000000e+00> : vector<2x32xf32>
    %272 = tpu.matmul %263, %271, %cst_127 {dimension_numbers = #tpu.dot_dimension_numbers<[1], [0], [0], [1], [0, 0, 1, 1], [], []>} : vector<2x32xbf16>, vector<32x32xbf16>, vector<2x32xf32> -> vector<2x32xf32>
    %273 = vector.extract_strided_slice %262 {offsets = [0, 0, 0], sizes = [1, 2, 32], strides = [1, 1, 1]} : vector<3x2x32xf32> to vector<1x2x32xf32>
    %274 = vector.shape_cast %273 : vector<1x2x32xf32> to vector<2x32xf32>
    %275 = arith.addf %274, %266 : vector<2x32xf32>
    %276 = arith.negf %275 : vector<2x32xf32>
    %277 = math.exp %276 : vector<2x32xf32>
    %cst_128 = arith.constant 1.000000e+00 : f32
    %278 = vector.broadcast %cst_128 : f32 to vector<2x32xf32>
    %279 = arith.addf %278, %277 : vector<2x32xf32>
    %280 = arith.divf %278, %279 : vector<2x32xf32>
    %281 = vector.extract_strided_slice %262 {offsets = [1, 0, 0], sizes = [1, 2, 32], strides = [1, 1, 1]} : vector<3x2x32xf32> to vector<1x2x32xf32>
    %282 = vector.shape_cast %281 : vector<1x2x32xf32> to vector<2x32xf32>
    %283 = arith.addf %282, %269 : vector<2x32xf32>
    %284 = arith.negf %283 : vector<2x32xf32>
    %285 = math.exp %284 : vector<2x32xf32>
    %cst_129 = arith.constant 1.000000e+00 : f32
    %286 = vector.broadcast %cst_129 : f32 to vector<2x32xf32>
    %287 = arith.addf %286, %285 : vector<2x32xf32>
    %288 = arith.divf %286, %287 : vector<2x32xf32>
    %289 = vector.extract_strided_slice %262 {offsets = [2, 0, 0], sizes = [1, 2, 32], strides = [1, 1, 1]} : vector<3x2x32xf32> to vector<1x2x32xf32>
    %290 = vector.shape_cast %289 : vector<1x2x32xf32> to vector<2x32xf32>
    %291 = vector.broadcast %0 : vector<1x32xf32> to vector<2x32xf32>
    %292 = arith.addf %272, %291 : vector<2x32xf32>
    %293 = arith.mulf %280, %292 : vector<2x32xf32>
    %294 = arith.addf %290, %293 : vector<2x32xf32>
    %295 = math.tanh %294 : vector<2x32xf32>
    %296 = arith.subf %255, %295 : vector<2x32xf32>
    %297 = arith.mulf %288, %296 : vector<2x32xf32>
    %298 = arith.addf %295, %297 : vector<2x32xf32>
    %299 = arith.index_cast %c6_i32 : i32 to index
    %c0_130 = arith.constant 0 : index
    %c0_131 = arith.constant 0 : index
    %300 = vector.load %arg4[%299, %c0_130, %c0_131] : memref<8x2x32xf32, #tpu.memory_space<vmem>>, vector<1x2x32xf32>
    %301 = vector.shape_cast %300 : vector<1x2x32xf32> to vector<2x32xf32>
    %302 = vector.shape_cast %298 : vector<2x32xf32> to vector<1x2x32xf32>
    tpu.vector_store %arg4[%299, %c0_130, %c0_131], %302 {strides = array<i32>} : memref<8x2x32xf32, #tpu.memory_space<vmem>>, vector<1x2x32xf32>,
    %c7_i32 = arith.constant 7 : i32
    %303 = arith.index_cast %c7_i32 : i32 to index
    %c0_132 = arith.constant 0 : index
    %c0_133 = arith.constant 0 : index
    %c0_134 = arith.constant 0 : index
    %304 = vector.load %arg1[%303, %c0_132, %c0_133, %c0_134] : memref<8x3x2x32xf32, #tpu.memory_space<vmem>>, vector<1x3x2x32xf32>
    %305 = vector.shape_cast %304 : vector<1x3x2x32xf32> to vector<3x2x32xf32>
    %306 = arith.truncf %298 : vector<2x32xf32> to vector<2x32xbf16>
    %c0_135 = arith.constant 0 : index
    %c0_136 = arith.constant 0 : index
    %c0_137 = arith.constant 0 : index
    %307 = vector.load %arg2[%c0_135, %c0_136, %c0_137] : memref<3x32x32xbf16, #tpu.memory_space<vmem>>, vector<1x32x32xbf16>
    %308 = vector.shape_cast %307 : vector<1x32x32xbf16> to vector<32x32xbf16>
    %cst_138 = arith.constant dense<0.000000e+00> : vector<2x32xf32>
    %309 = tpu.matmul %306, %308, %cst_138 {dimension_numbers = #tpu.dot_dimension_numbers<[1], [0], [0], [1], [0, 0, 1, 1], [], []>} : vector<2x32xbf16>, vector<32x32xbf16>, vector<2x32xf32> -> vector<2x32xf32>
    %c1_139 = arith.constant 1 : index
    %c0_140 = arith.constant 0 : index
    %c0_141 = arith.constant 0 : index
    %310 = vector.load %arg2[%c1_139, %c0_140, %c0_141] : memref<3x32x32xbf16, #tpu.memory_space<vmem>>, vector<1x32x32xbf16>
    %311 = vector.shape_cast %310 : vector<1x32x32xbf16> to vector<32x32xbf16>
    %cst_142 = arith.constant dense<0.000000e+00> : vector<2x32xf32>
    %312 = tpu.matmul %306, %311, %cst_142 {dimension_numbers = #tpu.dot_dimension_numbers<[1], [0], [0], [1], [0, 0, 1, 1], [], []>} : vector<2x32xbf16>, vector<32x32xbf16>, vector<2x32xf32> -> vector<2x32xf32>
    %c2_143 = arith.constant 2 : index
    %c0_144 = arith.constant 0 : index
    %c0_145 = arith.constant 0 : index
    %313 = vector.load %arg2[%c2_143, %c0_144, %c0_145] : memref<3x32x32xbf16, #tpu.memory_space<vmem>>, vector<1x32x32xbf16>
    %314 = vector.shape_cast %313 : vector<1x32x32xbf16> to vector<32x32xbf16>
    %cst_146 = arith.constant dense<0.000000e+00> : vector<2x32xf32>
    %315 = tpu.matmul %306, %314, %cst_146 {dimension_numbers = #tpu.dot_dimension_numbers<[1], [0], [0], [1], [0, 0, 1, 1], [], []>} : vector<2x32xbf16>, vector<32x32xbf16>, vector<2x32xf32> -> vector<2x32xf32>
    %316 = vector.extract_strided_slice %305 {offsets = [0, 0, 0], sizes = [1, 2, 32], strides = [1, 1, 1]} : vector<3x2x32xf32> to vector<1x2x32xf32>
    %317 = vector.shape_cast %316 : vector<1x2x32xf32> to vector<2x32xf32>
    %318 = arith.addf %317, %309 : vector<2x32xf32>
    %319 = arith.negf %318 : vector<2x32xf32>
    %320 = math.exp %319 : vector<2x32xf32>
    %cst_147 = arith.constant 1.000000e+00 : f32
    %321 = vector.broadcast %cst_147 : f32 to vector<2x32xf32>
    %322 = arith.addf %321, %320 : vector<2x32xf32>
    %323 = arith.divf %321, %322 : vector<2x32xf32>
    %324 = vector.extract_strided_slice %305 {offsets = [1, 0, 0], sizes = [1, 2, 32], strides = [1, 1, 1]} : vector<3x2x32xf32> to vector<1x2x32xf32>
    %325 = vector.shape_cast %324 : vector<1x2x32xf32> to vector<2x32xf32>
    %326 = arith.addf %325, %312 : vector<2x32xf32>
    %327 = arith.negf %326 : vector<2x32xf32>
    %328 = math.exp %327 : vector<2x32xf32>
    %cst_148 = arith.constant 1.000000e+00 : f32
    %329 = vector.broadcast %cst_148 : f32 to vector<2x32xf32>
    %330 = arith.addf %329, %328 : vector<2x32xf32>
    %331 = arith.divf %329, %330 : vector<2x32xf32>
    %332 = vector.extract_strided_slice %305 {offsets = [2, 0, 0], sizes = [1, 2, 32], strides = [1, 1, 1]} : vector<3x2x32xf32> to vector<1x2x32xf32>
    %333 = vector.shape_cast %332 : vector<1x2x32xf32> to vector<2x32xf32>
    %334 = vector.broadcast %0 : vector<1x32xf32> to vector<2x32xf32>
    %335 = arith.addf %315, %334 : vector<2x32xf32>
    %336 = arith.mulf %323, %335 : vector<2x32xf32>
    %337 = arith.addf %333, %336 : vector<2x32xf32>
    %338 = math.tanh %337 : vector<2x32xf32>
    %339 = arith.subf %298, %338 : vector<2x32xf32>
    %340 = arith.mulf %331, %339 : vector<2x32xf32>
    %341 = arith.addf %338, %340 : vector<2x32xf32>
    %342 = arith.index_cast %c7_i32 : i32 to index
    %c0_149 = arith.constant 0 : index
    %c0_150 = arith.constant 0 : index
    %343 = vector.load %arg4[%342, %c0_149, %c0_150] : memref<8x2x32xf32, #tpu.memory_space<vmem>>, vector<1x2x32xf32>
    %344 = vector.shape_cast %343 : vector<1x2x32xf32> to vector<2x32xf32>
    %345 = vector.shape_cast %341 : vector<2x32xf32> to vector<1x2x32xf32>
    tpu.vector_store %arg4[%342, %c0_149, %c0_150], %345 {strides = array<i32>} : memref<8x2x32xf32, #tpu.memory_space<vmem>>, vector<1x2x32xf32>,
    %c8_i32 = arith.constant 8 : i32
    return
  }
  func.func @transform_0(%arg0: i32) -> (i32, i32, i32, i32) {
    %c0_i32 = arith.constant 0 : i32
    %c0_i32_0 = arith.constant 0 : i32
    %c0_i32_1 = arith.constant 0 : i32
    %c0_i32_2 = arith.constant 0 : i32
    return %c0_i32, %c0_i32_0, %arg0, %c0_i32_1 : i32, i32, i32, i32
  }
  func.func @transform_1(%arg0: i32) -> (i32, i32, i32) {
    %c0_i32 = arith.constant 0 : i32
    %c0_i32_0 = arith.constant 0 : i32
    %c0_i32_1 = arith.constant 0 : i32
    %c0_i32_2 = arith.constant 0 : i32
    return %c0_i32, %c0_i32_0, %c0_i32_1 : i32, i32, i32
  }
  func.func @transform_2(%arg0: i32) -> (i32, i32) {
    %c0_i32 = arith.constant 0 : i32
    %c0_i32_0 = arith.constant 0 : i32
    %c0_i32_1 = arith.constant 0 : i32
    return %c0_i32, %c0_i32_0 : i32, i32
  }
  func.func @transform_3(%arg0: i32) -> (i32, i32, i32) {
    %c0_i32 = arith.constant 0 : i32
    %c0_i32_0 = arith.constant 0 : i32
    %c0_i32_1 = arith.constant 0 : i32
    return %c0_i32, %arg0, %c0_i32_0 : i32, i32, i32
  }
}

</mosaic_0001>

<llo_original>
// kernel: uni_gru_forward.5
$region0: #{uni_gru_forward.5}
  #allocation0 [shape = 'u32[]', space=smem, size = 0x4, offset = 0x4, fixed_abs, tag = 'smem constant byte address 0x4 - core index']
  #allocation1 [shape = 'u32[144,128]{1,0:T(1,128)}', space=vmem, size = 0x12000, scoped, tag = 'internal scratch']
  %s0 = inlined_call_operand.vmem [shape: f32[2,256], index: 0, kind: input, shape index: {}]
  %s1 = inlined_call_operand.vmem [shape: f32[256,4], index: 1, kind: input, shape index: {}]
  %s2 = inlined_call_operand.vmem [shape: f32[1,4], index: 2, kind: input, shape index: {}]
  %s3 = inlined_call_operand.hbm [shape: f32[2,4], index: 3, kind: output, shape index: {}]
  %s4 = sld [smem:[#allocation0]]
  $region22: #{uni_gru_forward.5} parent=0
    _
  %s6 = ssub.s32 1, %s4
  %s7 = scalar_select 0, %s6, %s4
  $region1: #{uni_gru_forward.5} parent=0
    #allocation2 [shape = 'u8[1024]{0}', space=vmem, size = 0x400, scoped, tag = 'output window, operand 0, single buffered']
    #allocation3 [shape = 's32[1]{0}', space=sflag, size = 0x4, scoped, tag = 'scoped memory for uni_gru_forward.5']
    %8 = vsyncpa [#allocation3], 0
    // Predicated region
    $region2: #{uni_gru_forward.5} parent=1 // pred_check
      _
    $region3: #{uni_gru_forward.5} parent=1 // pred_check_branch
      %10 = sbr.rel (0) target = $region5
    $region4: #{uni_gru_forward.5} parent=1 // pred_region
      _
    $region5: #{uni_gru_forward.5} parent=1 // pred_fallthru
      _
    // Predicated region
    $region6: #{uni_gru_forward.5} parent=1 // pred_check
      _
    $region7: #{uni_gru_forward.5} parent=1 // pred_check_branch
      %12 = sbr.rel (0) target = $region9
    $region8: #{uni_gru_forward.5} parent=1 // pred_region
      _
    $region9: #{uni_gru_forward.5} parent=1 // pred_fallthru
      _
    // Predicated region
    $region10: #{uni_gru_forward.5} parent=1 // pred_check
      _
    $region11: #{uni_gru_forward.5} parent=1 // pred_check_branch
      %14 = sbr.rel (0) target = $region13
    $region12: #{uni_gru_forward.5} parent=1 // pred_region
      _
    $region13: #{uni_gru_forward.5} parent=1 // pred_fallthru
      _
    %v15 = vld [vmem:[%s0] sm:$0xf]
    %v16 = vld [vmem:[%s1] sm:$0xff]
    %v17 = vld [vmem:[%s1 + $0x8] sm:$0xff]
    %v18 = vld [vmem:[%s1 + $0x10] sm:$0xff]
    %v19 = vld [vmem:[%s1 + $0x18] sm:$0xff]
    %v20 = vld [vmem:[%s1 + $0x20] sm:$0xff]
    %v21 = vld [vmem:[%s1 + $0x28] sm:$0xff]
    %v22 = vld [vmem:[%s1 + $0x30] sm:$0xff]
    %v23 = vld [vmem:[%s1 + $0x38] sm:$0xff]
    %v24 = vld [vmem:[%s1 + $0x40] sm:$0xff]
    %v25 = vld [vmem:[%s1 + $0x48] sm:$0xff]
    %v26 = vld [vmem:[%s1 + $0x50] sm:$0xff]
    %v27 = vld [vmem:[%s1 + $0x58] sm:$0xff]
    %v28 = vld [vmem:[%s1 + $0x60] sm:$0xff]
    %v29 = vld [vmem:[%s1 + $0x68] sm:$0xff]
    %v30 = vld [vmem:[%s1 + $0x70] sm:$0xff]
    %v31 = vld [vmem:[%s1 + $0x78] sm:$0xff]
    %v32 = vld [vmem:[%s1 + $0x80] sm:$0xff]
    %v33 = vld [vmem:[%s1 + $0x88] sm:$0xff]
    %v34 = vld [vmem:[%s1 + $0x90] sm:$0xff]
    %v35 = vld [vmem:[%s1 + $0x98] sm:$0xff]
    %v36 = vld [vmem:[%s1 + $0xa0] sm:$0xff]
    %v37 = vld [vmem:[%s1 + $0xa8] sm:$0xff]
    %v38 = vld [vmem:[%s1 + $0xb0] sm:$0xff]
    %v39 = vld [vmem:[%s1 + $0xb8] sm:$0xff]
    %v40 = vld [vmem:[%s1 + $0xc0] sm:$0xff]
    %v41 = vld [vmem:[%s1 + $0xc8] sm:$0xff]
    %v42 = vld [vmem:[%s1 + $0xd0] sm:$0xff]
    %v43 = vld [vmem:[%s1 + $0xd8] sm:$0xff]
    %v44 = vld [vmem:[%s1 + $0xe0] sm:$0xff]
    %v45 = vld [vmem:[%s1 + $0xe8] sm:$0xff]
    %v46 = vld [vmem:[%s1 + $0xf0] sm:$0xff]
    %v47 = vld [vmem:[%s1 + $0xf8] sm:$0xff]
    %v48 = vld [vmem:[%s2] sm:$0x1]
    %v50 = vlaneseq
    %v51 = vshrl.u32 %v50, 7
    %v52 = vsub.s32 0, %v51
    %v53 = vrot.slane %v48, %v52
    %v57 = vunpack.c.l.s4 1983009808
    %v58 = vunpack.c.0.s8 %v57
    %v59 = vlaneseq
    %v60 = vshrl.u32 %v59, 7
    %v61 = vsub.s32 %v58, %v60
    %v62 = vrot.slane %v15, %v61
    %v63 = vcombine.high %v62, %v62
    %66 = vmatprep.subr.mxu0 0.0
    %67 = vmatpush1.msra.mxu0 %v31
    %68 = vmatprep.subr.mxu0 0.0
    %69 = vmatpush1.msra.mxu0 %v30
    %70 = vmatprep.subr.mxu0 0.0
    %71 = vmatpush1.msra.mxu0 %v29
    %72 = vmatprep.subr.mxu0 0.0
    %73 = vmatpush1.msra.mxu0 %v28
    %74 = vmatprep.subr.mxu0 0.0
    %75 = vmatpush1.msra.mxu0 %v27
    %76 = vmatprep.subr.mxu0 0.0
    %77 = vmatpush1.msra.mxu0 %v26
    %78 = vmatprep.subr.mxu0 0.0
    %79 = vmatpush1.msra.mxu0 %v25
    %80 = vmatprep.subr.mxu0 0.0
    %81 = vmatpush1.msra.mxu0 %v24
    %82 = vmatprep.subr.mxu0 0.0
    %83 = vmatpush1.msra.mxu0 %v23
    %84 = vmatprep.subr.mxu0 0.0
    %85 = vmatpush1.msra.mxu0 %v22
    %86 = vmatprep.subr.mxu0 0.0
    %87 = vmatpush1.msra.mxu0 %v21
    %88 = vmatprep.subr.mxu0 0.0
    %89 = vmatpush1.msra.mxu0 %v20
    %90 = vmatprep.subr.mxu0 0.0
    %91 = vmatpush1.msra.mxu0 %v19
    %92 = vmatprep.subr.mxu0 0.0
    %93 = vmatpush1.msra.mxu0 %v18
    %94 = vmatprep.subr.mxu0 0.0
    %95 = vmatpush1.msra.mxu0 %v17
    %96 = vmatprep.subr.mxu0 0.0
    %97 = vmatpush1.msra.mxu0 %v16
    %98 = vmatprep.subr.mxu0 0.0
    %99 = vmatpush2.msra.mxu0 %v47
    %100 = vmatprep.subr.mxu0 0.0
    %101 = vmatpush2.msra.mxu0 %v46
    %102 = vmatprep.subr.mxu0 0.0
    %103 = vmatpush2.msra.mxu0 %v45
    %104 = vmatprep.subr.mxu0 0.0
    %105 = vmatpush2.msra.mxu0 %v44
    %106 = vmatprep.subr.mxu0 0.0
    %107 = vmatpush2.msra.mxu0 %v43
    %108 = vmatprep.subr.mxu0 0.0
    %109 = vmatpush2.msra.mxu0 %v42
    %110 = vmatprep.subr.mxu0 0.0
    %111 = vmatpush2.msra.mxu0 %v41
    %112 = vmatprep.subr.mxu0 0.0
    %113 = vmatpush2.msra.mxu0 %v40
    %114 = vmatprep.subr.mxu0 0.0
    %115 = vmatpush2.msra.mxu0 %v39
    %116 = vmatprep.subr.mxu0 0.0
    %117 = vmatpush2.msra.mxu0 %v38
    %118 = vmatprep.subr.mxu0 0.0
    %119 = vmatpush2.msra.mxu0 %v37
    %120 = vmatprep.subr.mxu0 0.0
    %121 = vmatpush2.msra.mxu0 %v36
    %122 = vmatprep.subr.mxu0 0.0
    %123 = vmatpush2.msra.mxu0 %v35
    %124 = vmatprep.subr.mxu0 0.0
    %125 = vmatpush2.msra.mxu0 %v34
    %126 = vmatprep.subr.mxu0 0.0
    %127 = vmatpush2.msra.mxu0 %v33
    %128 = vmatprep.subr.mxu0 0.0
    %129 = vmatpush2.msra.mxu0 %v32
    %130 = vmatprep.mubr.f32.mxu0 %v63
    %131 = vmatmul.mubr.f32.gmra.mxu0 %v62
    %v132 = vpop.f32.mrf.mxu0
    %v133 = vadd.f32 %v53, %v132
    %v134 = vpop.f32.mrf.mxu0
    %135 = vdwg.mxu0
    %v136 = vxor.u32 %v133, 2147483648
    %v137 = vmul.f32 %v136, 1.442695
    %v138 = vpow.pop %v137
    %v139 = vadd.f32 %v138, 1.0
    %v140 = vrcp.pop %v139
    %v141 = vmul.f32 1.0, %v140
    %vm142 = vcmask 25600
    %143 = vst.msk [vmem:[#allocation2] sm:$0x3] %vm142, %v141
    // Predicated region
    $region14: #{uni_gru_forward.5} parent=1 // pred_check
      _
    $region15: #{uni_gru_forward.5} parent=1 // pred_check_branch
      %145 = sbr.rel (0) target = $region17
    $region16: #{uni_gru_forward.5} parent=1 // pred_region
      %s147 = ssub.s32 32, 32
      %148 = vsyncadd [#allocation3], %s147
      %s150 = sshll.u32 [#allocation2], 4
      %s151 = int_to_ptr.vmem [resolvable:$true] %s150
      %153 = dma.vmem_to_hbm [thread:$0]  %s151, 32, %s3, [#allocation3]
    $region17: #{uni_gru_forward.5} parent=1 // pred_fallthru
      _
    // Predicated region
    $region18: #{uni_gru_forward.5} parent=1 // pred_check
      _
    $region19: #{uni_gru_forward.5} parent=1 // pred_check_branch
      %155 = sbr.rel (0) target = $region21
    $region20: #{uni_gru_forward.5} parent=1 // pred_region
      %156 = dma.done [#allocation3], 32
    $region21: #{uni_gru_forward.5} parent=1 // pred_fallthru
      _
    %157 = vsyncpa [#allocation3], 1

// kernel: uni_gru_forward.3
$region0: #{uni_gru_forward.3}
  #allocation0 [shape = 'u32[]', space=smem, size = 0x4, offset = 0x4, fixed_abs, tag = 'smem constant byte address 0x4 - core index']
  #allocation1 [shape = 'u32[144,128]{1,0:T(1,128)}', space=vmem, size = 0x12000, scoped, tag = 'internal scratch']
  %s0 = inlined_call_operand.vmem [shape: f32[8,3,2,32], index: 0, kind: input, shape index: {}]
  %s1 = inlined_call_operand.vmem [shape: bf16[3,32,32], index: 1, kind: input, shape index: {}]
  %s2 = inlined_call_operand.vmem [shape: f32[1,32], index: 2, kind: input, shape index: {}]
  %s3 = inlined_call_operand.vmem [shape: f32[8,2,32], index: 3, kind: output, shape index: {}]
  %s4 = sld [smem:[#allocation0]]
  $region22: #{uni_gru_forward.3} parent=0
    _
  %s6 = ssub.s32 1, %s4
  %s7 = scalar_select 0, %s6, %s4
  // Predicated region
  $region2: #{uni_gru_forward.3} parent=0 // pred_check
    _
  $region3: #{uni_gru_forward.3} parent=0 // pred_check_branch
    %9 = sbr.rel (0) target = $region5
  $region4: #{uni_gru_forward.3} parent=0 // pred_region
    _
  $region5: #{uni_gru_forward.3} parent=0 // pred_fallthru
    _
  // Predicated region
  $region6: #{uni_gru_forward.3} parent=0 // pred_check
    _
  $region7: #{uni_gru_forward.3} parent=0 // pred_check_branch
    %11 = sbr.rel (0) target = $region9
  $region8: #{uni_gru_forward.3} parent=0 // pred_region
    _
  $region9: #{uni_gru_forward.3} parent=0 // pred_fallthru
    _
  // Predicated region
  $region10: #{uni_gru_forward.3} parent=0 // pred_check
    _
  $region11: #{uni_gru_forward.3} parent=0 // pred_check_branch
    %13 = sbr.rel (0) target = $region13
  $region12: #{uni_gru_forward.3} parent=0 // pred_region
    _
  $region13: #{uni_gru_forward.3} parent=0 // pred_fallthru
    _
  %v15 = vld [vmem:[%s2] sm:$0x1]
  %v16 = vld [vmem:[%s0] sm:$0x3]
  %v17 = vld [vmem:[%s0 + $0x2] sm:$0x3]
  %v18 = vld [vmem:[%s0 + $0x4] sm:$0x3]
  %v19 = vld [vmem:[%s1] sm:$0xf]
  %v20 = vld [vmem:[%s1 + $0x4] sm:$0xf]
  %v21 = vld [vmem:[%s1 + $0x8] sm:$0xf]
  %v22 = vld [vmem:[%s1 + $0xc] sm:$0xf]
  %v27 = vunpack.c.l.b16 %v19
  %v28 = vunpack.c.l.b16 %v20
  %v29 = vunpack.c.l.b16 %v21
  %v30 = vunpack.c.l.b16 %v22
  %v31 = vpack.c.b16 %v28, %v27
  %v32 = vpack.c.b16 %v30, %v29
  %vm35 = vcmask 261120
  %v37 = vsel %vm35, 0, 0
  %39 = vmatprep.subr.bf16.mxu0 0
  %40 = vmatpush1.bf16.msra.mxu0 0
  %41 = vmatprep.subr.bf16.mxu0 0
  %42 = vmatpush1.bf16.msra.mxu0 0
  %43 = vmatprep.subr.bf16.mxu0 0
  %44 = vmatpush1.bf16.msra.mxu0 0
  %45 = vmatprep.subr.bf16.mxu0 0
  %46 = vmatpush1.bf16.msra.mxu0 0
  %47 = vmatprep.subr.bf16.mxu0 0
  %48 = vmatpush1.bf16.msra.mxu0 0
  %49 = vmatprep.subr.bf16.mxu0 0
  %50 = vmatpush1.bf16.msra.mxu0 0
  %51 = vmatprep.subr.bf16.mxu0 0
  %52 = vmatpush1.bf16.msra.mxu0 %v32
  %53 = vmatprep.subr.bf16.mxu0 0
  %54 = vmatpush1.bf16.msra.mxu0 %v31
  %55 = vmatprep.subr.bf16.mxu0 0
  %56 = vmatpush2.bf16.msra.mxu0 0
  %57 = vmatprep.subr.bf16.mxu0 0
  %58 = vmatpush2.bf16.msra.mxu0 0
  %59 = vmatprep.subr.bf16.mxu0 0
  %60 = vmatpush2.bf16.msra.mxu0 0
  %61 = vmatprep.subr.bf16.mxu0 0
  %62 = vmatpush2.bf16.msra.mxu0 0
  %63 = vmatprep.subr.bf16.mxu0 0
  %64 = vmatpush2.bf16.msra.mxu0 0
  %65 = vmatprep.subr.bf16.mxu0 0
  %66 = vmatpush2.bf16.msra.mxu0 0
  %67 = vmatprep.subr.bf16.mxu0 0
  %68 = vmatpush2.bf16.msra.mxu0 0
  %69 = vmatprep.subr.bf16.mxu0 0
  %70 = vmatpush2.bf16.msra.mxu0 0
  %71 = vmatprep.mubr.bf16.mxu0 0
  %72 = vmatmul.mubr.bf16.gmra.mxu0 %v37
  %v73 = vpop.f32.mrf.mxu0
  %v74 = vadd.f32 0.0, %v73
  %v75 = vpop.f32.mrf.mxu0
  %v76 = vpop.f32.mrf.mxu0
  %v77 = vpop.f32.mrf.mxu0
  %78 = vdwg.mxu0
  %s79 = scalar_lea.vmem %s1, 16
  %v80 = vld [vmem:[%s79] sm:$0xf]
  %v81 = vld [vmem:[%s79 + $0x4] sm:$0xf]
  %v82 = vld [vmem:[%s79 + $0x8] sm:$0xf]
  %v83 = vld [vmem:[%s79 + $0xc] sm:$0xf]
  %v88 = vunpack.c.l.b16 %v80
  %v89 = vunpack.c.l.b16 %v81
  %v90 = vunpack.c.l.b16 %v82
  %v91 = vunpack.c.l.b16 %v83
  %v92 = vpack.c.b16 %v89, %v88
  %v93 = vpack.c.b16 %v91, %v90
  %96 = vmatprep.subr.bf16.mxu0 0
  %97 = vmatpush1.bf16.msra.mxu0 0
  %98 = vmatprep.subr.bf16.mxu0 0
  %99 = vmatpush1.bf16.msra.mxu0 0
  %100 = vmatprep.subr.bf16.mxu0 0
  %101 = vmatpush1.bf16.msra.mxu0 0
  %102 = vmatprep.subr.bf16.mxu0 0
  %103 = vmatpush1.bf16.msra.mxu0 0
  %104 = vmatprep.subr.bf16.mxu0 0
  %105 = vmatpush1.bf16.msra.mxu0 0
  %106 = vmatprep.subr.bf16.mxu0 0
  %107 = vmatpush1.bf16.msra.mxu0 0
  %108 = vmatprep.subr.bf16.mxu0 0
  %109 = vmatpush1.bf16.msra.mxu0 %v93
  %110 = vmatprep.subr.bf16.mxu0 0
  %111 = vmatpush1.bf16.msra.mxu0 %v92
  %112 = vmatprep.subr.bf16.mxu0 0
  %113 = vmatpush2.bf16.msra.mxu0 0
  %114 = vmatprep.subr.bf16.mxu0 0
  %115 = vmatpush2.bf16.msra.mxu0 0
  %116 = vmatprep.subr.bf16.mxu0 0
  %117 = vmatpush2.bf16.msra.mxu0 0
  %118 = vmatprep.subr.bf16.mxu0 0
  %119 = vmatpush2.bf16.msra.mxu0 0
  %120 = vmatprep.subr.bf16.mxu0 0
  %121 = vmatpush2.bf16.msra.mxu0 0
  %122 = vmatprep.subr.bf16.mxu0 0
  %123 = vmatpush2.bf16.msra.mxu0 0
  %124 = vmatprep.subr.bf16.mxu0 0
  %125 = vmatpush2.bf16.msra.mxu0 0
  %126 = vmatprep.subr.bf16.mxu0 0
  %127 = vmatpush2.bf16.msra.mxu0 0
  %128 = vmatprep.mubr.bf16.mxu0 0
  %129 = vmatmul.mubr.bf16.gmra.mxu0 %v37
  %v130 = vpop.f32.mrf.mxu0
  %v131 = vadd.f32 0.0, %v130
  %v132 = vpop.f32.mrf.mxu0
  %v133 = vpop.f32.mrf.mxu0
  %v134 = vpop.f32.mrf.mxu0
  %135 = vdwg.mxu0
  %s136 = scalar_lea.vmem %s1, 32
  %v137 = vld [vmem:[%s136] sm:$0xf]
  %v138 = vld [vmem:[%s136 + $0x4] sm:$0xf]
  %v139 = vld [vmem:[%s136 + $0x8] sm:$0xf]
  %v140 = vld [vmem:[%s136 + $0xc] sm:$0xf]
  %v141 = vadd.f32 %v16, %v74
  %v142 = vxor.u32 %v141, 2147483648
  %v143 = vmul.f32 %v142, 1.442695
  %v144 = vpow.pop %v143
  %v145 = vadd.f32 %v144, 1.0
  %v146 = vrcp.pop %v145
  %v147 = vmul.f32 1.0, %v146
  %v148 = vadd.f32 %v17, %v131
  %v149 = vxor.u32 %v148, 2147483648
  %v150 = vmul.f32 %v149, 1.442695
  %v151 = vpow.pop %v150
  %v152 = vadd.f32 %v151, 1.0
  %v153 = vrcp.pop %v152
  %v154 = vmul.f32 1.0, %v153
  %v156 = vlaneseq
  %v157 = vshrl.u32 %v156, 7
  %v158 = vsub.s32 0, %v157
  %v159 = vrot.slane %v15, %v158
  %v165 = vunpack.c.l.b16 %v137
  %v166 = vunpack.c.l.b16 %v138
  %v167 = vunpack.c.l.b16 %v139
  %v168 = vunpack.c.l.b16 %v140
  %v169 = vpack.c.b16 %v166, %v165
  %v170 = vpack.c.b16 %v168, %v167
  %173 = vmatprep.subr.bf16.mxu0 0
  %174 = vmatpush1.bf16.msra.mxu0 0
  %175 = vmatprep.subr.bf16.mxu0 0
  %176 = vmatpush1.bf16.msra.mxu0 0
  %177 = vmatprep.subr.bf16.mxu0 0
  %178 = vmatpush1.bf16.msra.mxu0 0
  %179 = vmatprep.subr.bf16.mxu0 0
  %180 = vmatpush1.bf16.msra.mxu0 0
  %181 = vmatprep.subr.bf16.mxu0 0
  %182 = vmatpush1.bf16.msra.mxu0 0
  %183 = vmatprep.subr.bf16.mxu0 0
  %184 = vmatpush1.bf16.msra.mxu0 0
  %185 = vmatprep.subr.bf16.mxu0 0
  %186 = vmatpush1.bf16.msra.mxu0 %v170
  %187 = vmatprep.subr.bf16.mxu0 0
  %188 = vmatpush1.bf16.msra.mxu0 %v169
  %189 = vmatprep.subr.bf16.mxu0 0
  %190 = vmatpush2.bf16.msra.mxu0 0
  %191 = vmatprep.subr.bf16.mxu0 0
  %192 = vmatpush2.bf16.msra.mxu0 0
  %193 = vmatprep.subr.bf16.mxu0 0
  %194 = vmatpush2.bf16.msra.mxu0 0
  %195 = vmatprep.subr.bf16.mxu0 0
  %196 = vmatpush2.bf16.msra.mxu0 0
  %197 = vmatprep.subr.bf16.mxu0 0
  %198 = vmatpush2.bf16.msra.mxu0 0
  %199 = vmatprep.subr.bf16.mxu0 0
  %200 = vmatpush2.bf16.msra.mxu0 0
  %201 = vmatprep.subr.bf16.mxu0 0
  %202 = vmatpush2.bf16.msra.mxu0 0
  %203 = vmatprep.subr.bf16.mxu0 0
  %204 = vmatpush2.bf16.msra.mxu0 0
  %205 = vmatprep.mubr.bf16.mxu0 0
  %206 = vmatmul.mubr.bf16.gmra.mxu0 %v37
  %v207 = vpop.f32.mrf.mxu0
  %v208 = vadd.f32 %v159, %v207
  %v209 = vpop.f32.mrf.mxu0
  %v210 = vpop.f32.mrf.mxu0
  %v211 = vpop.f32.mrf.mxu0
  %212 = vdwg.mxu0
  %v213 = vmul.f32 %v147, %v208
  %v214 = vadd.f32 %v18, %v213
  %v215 = vtanh.pop %v214
  %v216 = vsub.f32 0.0, %v215
  %v217 = vmul.f32 %v154, %v216
  %v218 = vadd.f32 %v215, %v217
  %vm219 = vcmask 254976
  %220 = vst.msk [vmem:[%s3] sm:$0x3] %vm219, %v218
  %s221 = scalar_lea.vmem %s0, 6
  %v222 = vld [vmem:[%s221] sm:$0x3]
  %v223 = vld [vmem:[%s221 + $0x2] sm:$0x3]
  %v224 = vld [vmem:[%s221 + $0x4] sm:$0x3]
  %v225 = vpack.c.bf16 %v218, %v218
  %v226 = vld [vmem:[%s1] sm:$0xf]
  %v227 = vld [vmem:[%s1 + $0x4] sm:$0xf]
  %v228 = vld [vmem:[%s1 + $0x8] sm:$0xf]
  %v229 = vld [vmem:[%s1 + $0xc] sm:$0xf]
  %v234 = vunpack.c.l.b16 %v226
  %v235 = vunpack.c.l.b16 %v227
  %v236 = vunpack.c.l.b16 %v228
  %v237 = vunpack.c.l.b16 %v229
  %v238 = vpack.c.b16 %v235, %v234
  %v239 = vpack.c.b16 %v237, %v236
  %v243 = vsel %vm35, %v225, 0
  %245 = vmatprep.subr.bf16.mxu0 0
  %246 = vmatpush1.bf16.msra.mxu0 0
  %247 = vmatprep.subr.bf16.mxu0 0
  %248 = vmatpush1.bf16.msra.mxu0 0
  %249 = vmatprep.subr.bf16.mxu0 0
  %250 = vmatpush1.bf16.msra.mxu0 0
  %251 = vmatprep.subr.bf16.mxu0 0
  %252 = vmatpush1.bf16.msra.mxu0 0
  %253 = vmatprep.subr.bf16.mxu0 0
  %254 = vmatpush1.bf16.msra.mxu0 0
  %255 = vmatprep.subr.bf16.mxu0 0
  %256 = vmatpush1.bf16.msra.mxu0 0
  %257 = vmatprep.subr.bf16.mxu0 0
  %258 = vmatpush1.bf16.msra.mxu0 %v239
  %259 = vmatprep.subr.bf16.mxu0 0
  %260 = vmatpush1.bf16.msra.mxu0 %v238
  %261 = vmatprep.subr.bf16.mxu0 0
  %262 = vmatpush2.bf16.msra.mxu0 0
  %263 = vmatprep.subr.bf16.mxu0 0
  %264 = vmatpush2.bf16.msra.mxu0 0
  %265 = vmatprep.subr.bf16.mxu0 0
  %266 = vmatpush2.bf16.msra.mxu0 0
  %267 = vmatprep.subr.bf16.mxu0 0
  %268 = vmatpush2.bf16.msra.mxu0 0
  %269 = vmatprep.subr.bf16.mxu0 0
  %270 = vmatpush2.bf16.msra.mxu0 0
  %271 = vmatprep.subr.bf16.mxu0 0
  %272 = vmatpush2.bf16.msra.mxu0 0
  %273 = vmatprep.subr.bf16.mxu0 0
  %274 = vmatpush2.bf16.msra.mxu0 0
  %275 = vmatprep.subr.bf16.mxu0 0
  %276 = vmatpush2.bf16.msra.mxu0 0
  %277 = vmatprep.mubr.bf16.mxu0 0
  %278 = vmatmul.mubr.bf16.gmra.mxu0 %v243
  %v279 = vpop.f32.mrf.mxu0
  %v280 = vadd.f32 0.0, %v279
  %v281 = vpop.f32.mrf.mxu0
  %v282 = vpop.f32.mrf.mxu0
  %v283 = vpop.f32.mrf.mxu0
  %284 = vdwg.mxu0
  %v285 = vld [vmem:[%s79] sm:$0xf]
  %v286 = vld [vmem:[%s79 + $0x4] sm:$0xf]
  %v287 = vld [vmem:[%s79 + $0x8] sm:$0xf]
  %v288 = vld [vmem:[%s79 + $0xc] sm:$0xf]
  %v293 = vunpack.c.l.b16 %v285
  %v294 = vunpack.c.l.b16 %v286
  %v295 = vunpack.c.l.b16 %v287
  %v296 = vunpack.c.l.b16 %v288
  %v297 = vpack.c.b16 %v294, %v293
  %v298 = vpack.c.b16 %v296, %v295
  %301 = vmatprep.subr.bf16.mxu0 0
  %302 = vmatpush1.bf16.msra.mxu0 0
  %303 = vmatprep.subr.bf16.mxu0 0
  %304 = vmatpush1.bf16.msra.mxu0 0
  %305 = vmatprep.subr.bf16.mxu0 0
  %306 = vmatpush1.bf16.msra.mxu0 0
  %307 = vmatprep.subr.bf16.mxu0 0
  %308 = vmatpush1.bf16.msra.mxu0 0
  %309 = vmatprep.subr.bf16.mxu0 0
  %310 = vmatpush1.bf16.msra.mxu0 0
  %311 = vmatprep.subr.bf16.mxu0 0
  %312 = vmatpush1.bf16.msra.mxu0 0
  %313 = vmatprep.subr.bf16.mxu0 0
  %314 = vmatpush1.bf16.msra.mxu0 %v298
  %315 = vmatprep.subr.bf16.mxu0 0
  %316 = vmatpush1.bf16.msra.mxu0 %v297
  %317 = vmatprep.subr.bf16.mxu0 0
  %318 = vmatpush2.bf16.msra.mxu0 0
  %319 = vmatprep.subr.bf16.mxu0 0
  %320 = vmatpush2.bf16.msra.mxu0 0
  %321 = vmatprep.subr.bf16.mxu0 0
  %322 = vmatpush2.bf16.msra.mxu0 0
  %323 = vmatprep.subr.bf16.mxu0 0
  %324 = vmatpush2.bf16.msra.mxu0 0
  %325 = vmatprep.subr.bf16.mxu0 0
  %326 = vmatpush2.bf16.msra.mxu0 0
  %327 = vmatprep.subr.bf16.mxu0 0
  %328 = vmatpush2.bf16.msra.mxu0 0
  %329 = vmatprep.subr.bf16.mxu0 0
  %330 = vmatpush2.bf16.msra.mxu0 0
  %331 = vmatprep.subr.bf16.mxu0 0
  %332 = vmatpush2.bf16.msra.mxu0 0
  %333 = vmatprep.mubr.bf16.mxu0 0
  %334 = vmatmul.mubr.bf16.gmra.mxu0 %v243
  %v335 = vpop.f32.mrf.mxu0
  %v336 = vadd.f32 0.0, %v335
  %v337 = vpop.f32.mrf.mxu0
  %v338 = vpop.f32.mrf.mxu0
  %v339 = vpop.f32.mrf.mxu0
  %340 = vdwg.mxu0
  %v341 = vld [vmem:[%s136] sm:$0xf]
  %v342 = vld [vmem:[%s136 + $0x4] sm:$0xf]
  %v343 = vld [vmem:[%s136 + $0x8] sm:$0xf]
  %v344 = vld [vmem:[%s136 + $0xc] sm:$0xf]
  %v345 = vadd.f32 %v222, %v280
  %v346 = vxor.u32 %v345, 2147483648
  %v347 = vmul.f32 %v346, 1.442695
  %v348 = vpow.pop %v347
  %v349 = vadd.f32 %v348, 1.0
  %v350 = vrcp.pop %v349
  %v351 = vmul.f32 1.0, %v350
  %v352 = vadd.f32 %v223, %v336
  %v353 = vxor.u32 %v352, 2147483648
  %v354 = vmul.f32 %v353, 1.442695
  %v355 = vpow.pop %v354
  %v356 = vadd.f32 %v355, 1.0
  %v357 = vrcp.pop %v356
  %v358 = vmul.f32 1.0, %v357
  %v363 = vunpack.c.l.b16 %v341
  %v364 = vunpack.c.l.b16 %v342
  %v365 = vunpack.c.l.b16 %v343
  %v366 = vunpack.c.l.b16 %v344
  %v367 = vpack.c.b16 %v364, %v363
  %v368 = vpack.c.b16 %v366, %v365
  %371 = vmatprep.subr.bf16.mxu0 0
  %372 = vmatpush1.bf16.msra.mxu0 0
  %373 = vmatprep.subr.bf16.mxu0 0
  %374 = vmatpush1.bf16.msra.mxu0 0
  %375 = vmatprep.subr.bf16.mxu0 0
  %376 = vmatpush1.bf16.msra.mxu0 0
  %377 = vmatprep.subr.bf16.mxu0 0
  %378 = vmatpush1.bf16.msra.mxu0 0
  %379 = vmatprep.subr.bf16.mxu0 0
  %380 = vmatpush1.bf16.msra.mxu0 0
  %381 = vmatprep.subr.bf16.mxu0 0
  %382 = vmatpush1.bf16.msra.mxu0 0
  %383 = vmatprep.subr.bf16.mxu0 0
  %384 = vmatpush1.bf16.msra.mxu0 %v368
  %385 = vmatprep.subr.bf16.mxu0 0
  %386 = vmatpush1.bf16.msra.mxu0 %v367
  %387 = vmatprep.subr.bf16.mxu0 0
  %388 = vmatpush2.bf16.msra.mxu0 0
  %389 = vmatprep.subr.bf16.mxu0 0
  %390 = vmatpush2.bf16.msra.mxu0 0
  %391 = vmatprep.subr.bf16.mxu0 0
  %392 = vmatpush2.bf16.msra.mxu0 0
  %393 = vmatprep.subr.bf16.mxu0 0
  %394 = vmatpush2.bf16.msra.mxu0 0
  %395 = vmatprep.subr.bf16.mxu0 0
  %396 = vmatpush2.bf16.msra.mxu0 0
  %397 = vmatprep.subr.bf16.mxu0 0
  %398 = vmatpush2.bf16.msra.mxu0 0
  %399 = vmatprep.subr.bf16.mxu0 0
  %400 = vmatpush2.bf16.msra.mxu0 0
  %401 = vmatprep.subr.bf16.mxu0 0
  %402 = vmatpush2.bf16.msra.mxu0 0
  %403 = vmatprep.mubr.bf16.mxu0 0
  %404 = vmatmul.mubr.bf16.gmra.mxu0 %v243
  %v405 = vpop.f32.mrf.mxu0
  %v406 = vadd.f32 %v159, %v405
  %v407 = vpop.f32.mrf.mxu0
  %v408 = vpop.f32.mrf.mxu0
  %v409 = vpop.f32.mrf.mxu0
  %410 = vdwg.mxu0
  %v411 = vmul.f32 %v351, %v406
  %v412 = vadd.f32 %v224, %v411
  %v413 = vtanh.pop %v412
  %v414 = vsub.f32 %v218, %v413
  %v415 = vmul.f32 %v358, %v414
  %v416 = vadd.f32 %v413, %v415
  %s417 = scalar_lea.vmem %s3, 2
  %418 = vst.msk [vmem:[%s417] sm:$0x3] %vm219, %v416
  %s419 = scalar_lea.vmem %s0, 12
  %v420 = vld [vmem:[%s419] sm:$0x3]
  %v421 = vld [vmem:[%s419 + $0x2] sm:$0x3]
  %v422 = vld [vmem:[%s419 + $0x4] sm:$0x3]
  %v423 = vpack.c.bf16 %v416, %v416
  %v424 = vld [vmem:[%s1] sm:$0xf]
  %v425 = vld [vmem:[%s1 + $0x4] sm:$0xf]
  %v426 = vld [vmem:[%s1 + $0x8] sm:$0xf]
  %v427 = vld [vmem:[%s1 + $0xc] sm:$0xf]
  %v432 = vunpack.c.l.b16 %v424
  %v433 = vunpack.c.l.b16 %v425
  %v434 = vunpack.c.l.b16 %v426
  %v435 = vunpack.c.l.b16 %v427
  %v436 = vpack.c.b16 %v433, %v432
  %v437 = vpack.c.b16 %v435, %v434
  %v441 = vsel %vm35, %v423, 0
  %443 = vmatprep.subr.bf16.mxu0 0
  %444 = vmatpush1.bf16.msra.mxu0 0
  %445 = vmatprep.subr.bf16.mxu0 0
  %446 = vmatpush1.bf16.msra.mxu0 0
  %447 = vmatprep.subr.bf16.mxu0 0
  %448 = vmatpush1.bf16.msra.mxu0 0
  %449 = vmatprep.subr.bf16.mxu0 0
  %450 = vmatpush1.bf16.msra.mxu0 0
  %451 = vmatprep.subr.bf16.mxu0 0
  %452 = vmatpush1.bf16.msra.mxu0 0
  %453 = vmatprep.subr.bf16.mxu0 0
  %454 = vmatpush1.bf16.msra.mxu0 0
  %455 = vmatprep.subr.bf16.mxu0 0
  %456 = vmatpush1.bf16.msra.mxu0 %v437
  %457 = vmatprep.subr.bf16.mxu0 0
  %458 = vmatpush1.bf16.msra.mxu0 %v436
  %459 = vmatprep.subr.bf16.mxu0 0
  %460 = vmatpush2.bf16.msra.mxu0 0
  %461 = vmatprep.subr.bf16.mxu0 0
  %462 = vmatpush2.bf16.msra.mxu0 0
  %463 = vmatprep.subr.bf16.mxu0 0
  %464 = vmatpush2.bf16.msra.mxu0 0
  %465 = vmatprep.subr.bf16.mxu0 0
  %466 = vmatpush2.bf16.msra.mxu0 0
  %467 = vmatprep.subr.bf16.mxu0 0
  %468 = vmatpush2.bf16.msra.mxu0 0
  %469 = vmatprep.subr.bf16.mxu0 0
  %470 = vmatpush2.bf16.msra.mxu0 0
  %471 = vmatprep.subr.bf16.mxu0 0
  %472 = vmatpush2.bf16.msra.mxu0 0
  %473 = vmatprep.subr.bf16.mxu0 0
  %474 = vmatpush2.bf16.msra.mxu0 0
  %475 = vmatprep.mubr.bf16.mxu0 0
  %476 = vmatmul.mubr.bf16.gmra.mxu0 %v441
  %v477 = vpop.f32.mrf.mxu0
  %v478 = vadd.f32 0.0, %v477
  %v479 = vpop.f32.mrf.mxu0
  %v480 = vpop.f32.mrf.mxu0
  %v481 = vpop.f32.mrf.mxu0
  %482 = vdwg.mxu0
  %v483 = vld [vmem:[%s79] sm:$0xf]
  %v484 = vld [vmem:[%s79 + $0x4] sm:$0xf]
  %v485 = vld [vmem:[%s79 + $0x8] sm:$0xf]
  %v486 = vld [vmem:[%s79 + $0xc] sm:$0xf]
  %v491 = vunpack.c.l.b16 %v483
  %v492 = vunpack.c.l.b16 %v484
  %v493 = vunpack.c.l.b16 %v485
  %v494 = vunpack.c.l.b16 %v486
  %v495 = vpack.c.b16 %v492, %v491
  %v496 = vpack.c.b16 %v494, %v493
  %499 = vmatprep.subr.bf16.mxu0 0
  %500 = vmatpush1.bf16.msra.mxu0 0
  %501 = vmatprep.subr.bf16.mxu0 0
  %502 = vmatpush1.bf16.msra.mxu0 0
  %503 = vmatprep.subr.bf16.mxu0 0
  %504 = vmatpush1.bf16.msra.mxu0 0
  %505 = vmatprep.subr.bf16.mxu0 0
  %506 = vmatpush1.bf16.msra.mxu0 0
  %507 = vmatprep.subr.bf16.mxu0 0
  %508 = vmatpush1.bf16.msra.mxu0 0
  %509 = vmatprep.subr.bf16.mxu0 0
  %510 = vmatpush1.bf16.msra.mxu0 0
  %511 = vmatprep.subr.bf16.mxu0 0
  %512 = vmatpush1.bf16.msra.mxu0 %v496
  %513 = vmatprep.subr.bf16.mxu0 0
  %514 = vmatpush1.bf16.msra.mxu0 %v495
  %515 = vmatprep.subr.bf16.mxu0 0
  %516 = vmatpush2.bf16.msra.mxu0 0
  %517 = vmatprep.subr.bf16.mxu0 0
  %518 = vmatpush2.bf16.msra.mxu0 0
  %519 = vmatprep.subr.bf16.mxu0 0
  %520 = vmatpush2.bf16.msra.mxu0 0
  %521 = vmatprep.subr.bf16.mxu0 0
  %522 = vmatpush2.bf16.msra.mxu0 0
  %523 = vmatprep.subr.bf16.mxu0 0
  %524 = vmatpush2.bf16.msra.mxu0 0
  %525 = vmatprep.subr.bf16.mxu0 0
  %526 = vmatpush2.bf16.msra.mxu0 0
  %527 = vmatprep.subr.bf16.mxu0 0
  %528 = vmatpush2.bf16.msra.mxu0 0
  %529 = vmatprep.subr.bf16.mxu0 0
  %530 = vmatpush2.bf16.msra.mxu0 0
  %531 = vmatprep.mubr.bf16.mxu0 0
  %532 = vmatmul.mubr.bf16.gmra.mxu0 %v441
  %v533 = vpop.f32.mrf.mxu0
  %v534 = vadd.f32 0.0, %v533
  %v535 = vpop.f32.mrf.mxu0
  %v536 = vpop.f32.mrf.mxu0
  %v537 = vpop.f32.mrf.mxu0
  %538 = vdwg.mxu0
  %v539 = vld [vmem:[%s136] sm:$0xf]
  %v540 = vld [vmem:[%s136 + $0x4] sm:$0xf]
  %v541 = vld [vmem:[%s136 + $0x8] sm:$0xf]
  %v542 = vld [vmem:[%s136 + $0xc] sm:$0xf]
  %v543 = vadd.f32 %v420, %v478
  %v544 = vxor.u32 %v543, 2147483648
  %v545 = vmul.f32 %v544, 1.442695
  %v546 = vpow.pop %v545
  %v547 = vadd.f32 %v546, 1.0
  %v548 = vrcp.pop %v547
  %v549 = vmul.f32 1.0, %v548
  %v550 = vadd.f32 %v421, %v534
  %v551 = vxor.u32 %v550, 2147483648
  %v552 = vmul.f32 %v551, 1.442695
  %v553 = vpow.pop %v552
  %v554 = vadd.f32 %v553, 1.0
  %v555 = vrcp.pop %v554
  %v556 = vmul.f32 1.0, %v555
  %v561 = vunpack.c.l.b16 %v539
  %v562 = vunpack.c.l.b16 %v540
  %v563 = vunpack.c.l.b16 %v541
  %v564 = vunpack.c.l.b16 %v542
  %v565 = vpack.c.b16 %v562, %v561
  %v566 = vpack.c.b16 %v564, %v563
  %569 = vmatprep.subr.bf16.mxu0 0
  %570 = vmatpush1.bf16.msra.mxu0 0
  %571 = vmatprep.subr.bf16.mxu0 0
  %572 = vmatpush1.bf16.msra.mxu0 0
  %573 = vmatprep.subr.bf16.mxu0 0
  %574 = vmatpush1.bf16.msra.mxu0 0
  %575 = vmatprep.subr.bf16.mxu0 0
  %576 = vmatpush1.bf16.msra.mxu0 0
  %577 = vmatprep.subr.bf16.mxu0 0
  %578 = vmatpush1.bf16.msra.mxu0 0
  %579 = vmatprep.subr.bf16.mxu0 0
  %580 = vmatpush1.bf16.msra.mxu0 0
  %581 = vmatprep.subr.bf16.mxu0 0
  %582 = vmatpush1.bf16.msra.mxu0 %v566
  %583 = vmatprep.subr.bf16.mxu0 0
  %584 = vmatpush1.bf16.msra.mxu0 %v565
  %585 = vmatprep.subr.bf16.mxu0 0
  %586 = vmatpush2.bf16.msra.mxu0 0
  %587 = vmatprep.subr.bf16.mxu0 0
  %588 = vmatpush2.bf16.msra.mxu0 0
  %589 = vmatprep.subr.bf16.mxu0 0
  %590 = vmatpush2.bf16.msra.mxu0 0
  %591 = vmatprep.subr.bf16.mxu0 0
  %592 = vmatpush2.bf16.msra.mxu0 0
  %593 = vmatprep.subr.bf16.mxu0 0
  %594 = vmatpush2.bf16.msra.mxu0 0
  %595 = vmatprep.subr.bf16.mxu0 0
  %596 = vmatpush2.bf16.msra.mxu0 0
  %597 = vmatprep.subr.bf16.mxu0 0
  %598 = vmatpush2.bf16.msra.mxu0 0
  %599 = vmatprep.subr.bf16.mxu0 0
  %600 = vmatpush2.bf16.msra.mxu0 0
  %601 = vmatprep.mubr.bf16.mxu0 0
  %602 = vmatmul.mubr.bf16.gmra.mxu0 %v441
  %v603 = vpop.f32.mrf.mxu0
  %v604 = vadd.f32 %v159, %v603
  %v605 = vpop.f32.mrf.mxu0
  %v606 = vpop.f32.mrf.mxu0
  %v607 = vpop.f32.mrf.mxu0
  %608 = vdwg.mxu0
  %v609 = vmul.f32 %v549, %v604
  %v610 = vadd.f32 %v422, %v609
  %v611 = vtanh.pop %v610
  %v612 = vsub.f32 %v416, %v611
  %v613 = vmul.f32 %v556, %v612
  %v614 = vadd.f32 %v611, %v613
  %s615 = scalar_lea.vmem %s3, 4
  %616 = vst.msk [vmem:[%s615] sm:$0x3] %vm219, %v614
  %s617 = scalar_lea.vmem %s0, 18
  %v618 = vld [vmem:[%s617] sm:$0x3]
  %v619 = vld [vmem:[%s617 + $0x2] sm:$0x3]
  %v620 = vld [vmem:[%s617 + $0x4] sm:$0x3]
  %v621 = vpack.c.bf16 %v614, %v614
  %v622 = vld [vmem:[%s1] sm:$0xf]
  %v623 = vld [vmem:[%s1 + $0x4] sm:$0xf]
  %v624 = vld [vmem:[%s1 + $0x8] sm:$0xf]
  %v625 = vld [vmem:[%s1 + $0xc] sm:$0xf]
  %v630 = vunpack.c.l.b16 %v622
  %v631 = vunpack.c.l.b16 %v623
  %v632 = vunpack.c.l.b16 %v624
  %v633 = vunpack.c.l.b16 %v625
  %v634 = vpack.c.b16 %v631, %v630
  %v635 = vpack.c.b16 %v633, %v632
  %v639 = vsel %vm35, %v621, 0
  %641 = vmatprep.subr.bf16.mxu0 0
  %642 = vmatpush1.bf16.msra.mxu0 0
  %643 = vmatprep.subr.bf16.mxu0 0
  %644 = vmatpush1.bf16.msra.mxu0 0
  %645 = vmatprep.subr.bf16.mxu0 0
  %646 = vmatpush1.bf16.msra.mxu0 0
  %647 = vmatprep.subr.bf16.mxu0 0
  %648 = vmatpush1.bf16.msra.mxu0 0
  %649 = vmatprep.subr.bf16.mxu0 0
  %650 = vmatpush1.bf16.msra.mxu0 0
  %651 = vmatprep.subr.bf16.mxu0 0
  %652 = vmatpush1.bf16.msra.mxu0 0
  %653 = vmatprep.subr.bf16.mxu0 0
  %654 = vmatpush1.bf16.msra.mxu0 %v635
  %655 = vmatprep.subr.bf16.mxu0 0
  %656 = vmatpush1.bf16.msra.mxu0 %v634
  %657 = vmatprep.subr.bf16.mxu0 0
  %658 = vmatpush2.bf16.msra.mxu0 0
  %659 = vmatprep.subr.bf16.mxu0 0
  %660 = vmatpush2.bf16.msra.mxu0 0
  %661 = vmatprep.subr.bf16.mxu0 0
  %662 = vmatpush2.bf16.msra.mxu0 0
  %663 = vmatprep.subr.bf16.mxu0 0
  %664 = vmatpush2.bf16.msra.mxu0 0
  %665 = vmatprep.subr.bf16.mxu0 0
  %666 = vmatpush2.bf16.msra.mxu0 0
  %667 = vmatprep.subr.bf16.mxu0 0
  %668 = vmatpush2.bf16.msra.mxu0 0
  %669 = vmatprep.subr.bf16.mxu0 0
  %670 = vmatpush2.bf16.msra.mxu0 0
  %671 = vmatprep.subr.bf16.mxu0 0
  %672 = vmatpush2.bf16.msra.mxu0 0
  %673 = vmatprep.mubr.bf16.mxu0 0
  %674 = vmatmul.mubr.bf16.gmra.mxu0 %v639
  %v675 = vpop.f32.mrf.mxu0
  %v676 = vadd.f32 0.0, %v675
  %v677 = vpop.f32.mrf.mxu0
  %v678 = vpop.f32.mrf.mxu0
  %v679 = vpop.f32.mrf.mxu0
  %680 = vdwg.mxu0
  %v681 = vld [vmem:[%s79] sm:$0xf]
  %v682 = vld [vmem:[%s79 + $0x4] sm:$0xf]
  %v683 = vld [vmem:[%s79 + $0x8] sm:$0xf]
  %v684 = vld [vmem:[%s79 + $0xc] sm:$0xf]
  %v689 = vunpack.c.l.b16 %v681
  %v690 = vunpack.c.l.b16 %v682
  %v691 = vunpack.c.l.b16 %v683
  %v692 = vunpack.c.l.b16 %v684
  %v693 = vpack.c.b16 %v690, %v689
  %v694 = vpack.c.b16 %v692, %v691
  %697 = vmatprep.subr.bf16.mxu0 0
  %698 = vmatpush1.bf16.msra.mxu0 0
  %699 = vmatprep.subr.bf16.mxu0 0
  %700 = vmatpush1.bf16.msra.mxu0 0
  %701 = vmatprep.subr.bf16.mxu0 0
  %702 = vmatpush1.bf16.msra.mxu0 0
  %703 = vmatprep.subr.bf16.mxu0 0
  %704 = vmatpush1.bf16.msra.mxu0 0
  %705 = vmatprep.subr.bf16.mxu0 0
  %706 = vmatpush1.bf16.msra.mxu0 0
  %707 = vmatprep.subr.bf16.mxu0 0
  %708 = vmatpush1.bf16.msra.mxu0 0
  %709 = vmatprep.subr.bf16.mxu0 0
  %710 = vmatpush1.bf16.msra.mxu0 %v694
  %711 = vmatprep.subr.bf16.mxu0 0
  %712 = vmatpush1.bf16.msra.mxu0 %v693
  %713 = vmatprep.subr.bf16.mxu0 0
  %714 = vmatpush2.bf16.msra.mxu0 0
  %715 = vmatprep.subr.bf16.mxu0 0
  %716 = vmatpush2.bf16.msra.mxu0 0
  %717 = vmatprep.subr.bf16.mxu0 0
  %718 = vmatpush2.bf16.msra.mxu0 0
  %719 = vmatprep.subr.bf16.mxu0 0
  %720 = vmatpush2.bf16.msra.mxu0 0
  %721 = vmatprep.subr.bf16.mxu0 0
  %722 = vmatpush2.bf16.msra.mxu0 0
  %723 = vmatprep.subr.bf16.mxu0 0
  %724 = vmatpush2.bf16.msra.mxu0 0
  %725 = vmatprep.subr.bf16.mxu0 0
  %726 = vmatpush2.bf16.msra.mxu0 0
  %727 = vmatprep.subr.bf16.mxu0 0
  %728 = vmatpush2.bf16.msra.mxu0 0
  %729 = vmatprep.mubr.bf16.mxu0 0
  %730 = vmatmul.mubr.bf16.gmra.mxu0 %v639
  %v731 = vpop.f32.mrf.mxu0
  %v732 = vadd.f32 0.0, %v731
  %v733 = vpop.f32.mrf.mxu0
  %v734 = vpop.f32.mrf.mxu0
  %v735 = vpop.f32.mrf.mxu0
  %736 = vdwg.mxu0
  %v737 = vld [vmem:[%s136] sm:$0xf]
  %v738 = vld [vmem:[%s136 + $0x4] sm:$0xf]
  %v739 = vld [vmem:[%s136 + $0x8] sm:$0xf]
  %v740 = vld [vmem:[%s136 + $0xc] sm:$0xf]
  %v741 = vadd.f32 %v618, %v676
  %v742 = vxor.u32 %v741, 2147483648
  %v743 = vmul.f32 %v742, 1.442695
  %v744 = vpow.pop %v743
  %v745 = vadd.f32 %v744, 1.0
  %v746 = vrcp.pop %v745
  %v747 = vmul.f32 1.0, %v746
  %v748 = vadd.f32 %v619, %v732
  %v749 = vxor.u32 %v748, 2147483648
  %v750 = vmul.f32 %v749, 1.442695
  %v751 = vpow.pop %v750
  %v752 = vadd.f32 %v751, 1.0
  %v753 = vrcp.pop %v752
  %v754 = vmul.f32 1.0, %v753
  %v759 = vunpack.c.l.b16 %v737
  %v760 = vunpack.c.l.b16 %v738
  %v761 = vunpack.c.l.b16 %v739
  %v762 = vunpack.c.l.b16 %v740
  %v763 = vpack.c.b16 %v760, %v759
  %v764 = vpack.c.b16 %v762, %v761
  %767 = vmatprep.subr.bf16.mxu0 0
  %768 = vmatpush1.bf16.msra.mxu0 0
  %769 = vmatprep.subr.bf16.mxu0 0
  %770 = vmatpush1.bf16.msra.mxu0 0
  %771 = vmatprep.subr.bf16.mxu0 0
  %772 = vmatpush1.bf16.msra.mxu0 0
  %773 = vmatprep.subr.bf16.mxu0 0
  %774 = vmatpush1.bf16.msra.mxu0 0
  %775 = vmatprep.subr.bf16.mxu0 0
  %776 = vmatpush1.bf16.msra.mxu0 0
  %777 = vmatprep.subr.bf16.mxu0 0
  %778 = vmatpush1.bf16.msra.mxu0 0
  %779 = vmatprep.subr.bf16.mxu0 0
  %780 = vmatpush1.bf16.msra.mxu0 %v764
  %781 = vmatprep.subr.bf16.mxu0 0
  %782 = vmatpush1.bf16.msra.mxu0 %v763
  %783 = vmatprep.subr.bf16.mxu0 0
  %784 = vmatpush2.bf16.msra.mxu0 0
  %785 = vmatprep.subr.bf16.mxu0 0
  %786 = vmatpush2.bf16.msra.mxu0 0
  %787 = vmatprep.subr.bf16.mxu0 0
  %788 = vmatpush2.bf16.msra.mxu0 0
  %789 = vmatprep.subr.bf16.mxu0 0
  %790 = vmatpush2.bf16.msra.mxu0 0
  %791 = vmatprep.subr.bf16.mxu0 0
  %792 = vmatpush2.bf16.msra.mxu0 0
  %793 = vmatprep.subr.bf16.mxu0 0
  %794 = vmatpush2.bf16.msra.mxu0 0
  %795 = vmatprep.subr.bf16.mxu0 0
  %796 = vmatpush2.bf16.msra.mxu0 0
  %797 = vmatprep.subr.bf16.mxu0 0
  %798 = vmatpush2.bf16.msra.mxu0 0
  %799 = vmatprep.mubr.bf16.mxu0 0
  %800 = vmatmul.mubr.bf16.gmra.mxu0 %v639
  %v801 = vpop.f32.mrf.mxu0
  %v802 = vadd.f32 %v159, %v801
  %v803 = vpop.f32.mrf.mxu0
  %v804 = vpop.f32.mrf.mxu0
  %v805 = vpop.f32.mrf.mxu0
  %806 = vdwg.mxu0
  %v807 = vmul.f32 %v747, %v802
  %v808 = vadd.f32 %v620, %v807
  %v809 = vtanh.pop %v808
  %v810 = vsub.f32 %v614, %v809
  %v811 = vmul.f32 %v754, %v810
  %v812 = vadd.f32 %v809, %v811
  %s813 = scalar_lea.vmem %s3, 6
  %814 = vst.msk [vmem:[%s813] sm:$0x3] %vm219, %v812
  %s815 = scalar_lea.vmem %s0, 24
  %v816 = vld [vmem:[%s815] sm:$0x3]
  %v817 = vld [vmem:[%s815 + $0x2] sm:$0x3]
  %v818 = vld [vmem:[%s815 + $0x4] sm:$0x3]
  %v819 = vpack.c.bf16 %v812, %v812
  %v820 = vld [vmem:[%s1] sm:$0xf]
  %v821 = vld [vmem:[%s1 + $0x4] sm:$0xf]
  %v822 = vld [vmem:[%s1 + $0x8] sm:$0xf]
  %v823 = vld [vmem:[%s1 + $0xc] sm:$0xf]
  %v828 = vunpack.c.l.b16 %v820
  %v829 = vunpack.c.l.b16 %v821
  %v830 = vunpack.c.l.b16 %v822
  %v831 = vunpack.c.l.b16 %v823
  %v832 = vpack.c.b16 %v829, %v828
  %v833 = vpack.c.b16 %v831, %v830
  %v837 = vsel %vm35, %v819, 0
  %839 = vmatprep.subr.bf16.mxu0 0
  %840 = vmatpush1.bf16.msra.mxu0 0
  %841 = vmatprep.subr.bf16.mxu0 0
  %842 = vmatpush1.bf16.msra.mxu0 0
  %843 = vmatprep.subr.bf16.mxu0 0
  %844 = vmatpush1.bf16.msra.mxu0 0
  %845 = vmatprep.subr.bf16.mxu0 0
  %846 = vmatpush1.bf16.msra.mxu0 0
  %847 = vmatprep.subr.bf16.mxu0 0
  %848 = vmatpush1.bf16.msra.mxu0 0
  %849 = vmatprep.subr.bf16.mxu0 0
  %850 = vmatpush1.bf16.msra.mxu0 0
  %851 = vmatprep.subr.bf16.mxu0 0
  %852 = vmatpush1.bf16.msra.mxu0 %v833
  %853 = vmatprep.subr.bf16.mxu0 0
  %854 = vmatpush1.bf16.msra.mxu0 %v832
  %855 = vmatprep.subr.bf16.mxu0 0
  %856 = vmatpush2.bf16.msra.mxu0 0
  %857 = vmatprep.subr.bf16.mxu0 0
  %858 = vmatpush2.bf16.msra.mxu0 0
  %859 = vmatprep.subr.bf16.mxu0 0
  %860 = vmatpush2.bf16.msra.mxu0 0
  %861 = vmatprep.subr.bf16.mxu0 0
  %862 = vmatpush2.bf16.msra.mxu0 0
  %863 = vmatprep.subr.bf16.mxu0 0
  %864 = vmatpush2.bf16.msra.mxu0 0
  %865 = vmatprep.subr.bf16.mxu0 0
  %866 = vmatpush2.bf16.msra.mxu0 0
  %867 = vmatprep.subr.bf16.mxu0 0
  %868 = vmatpush2.bf16.msra.mxu0 0
  %869 = vmatprep.subr.bf16.mxu0 0
  %870 = vmatpush2.bf16.msra.mxu0 0
  %871 = vmatprep.mubr.bf16.mxu0 0
  %872 = vmatmul.mubr.bf16.gmra.mxu0 %v837
  %v873 = vpop.f32.mrf.mxu0
  %v874 = vadd.f32 0.0, %v873
  %v875 = vpop.f32.mrf.mxu0
  %v876 = vpop.f32.mrf.mxu0
  %v877 = vpop.f32.mrf.mxu0
  %878 = vdwg.mxu0
  %v879 = vld [vmem:[%s79] sm:$0xf]
  %v880 = vld [vmem:[%s79 + $0x4] sm:$0xf]
  %v881 = vld [vmem:[%s79 + $0x8] sm:$0xf]
  %v882 = vld [vmem:[%s79 + $0xc] sm:$0xf]
  %v887 = vunpack.c.l.b16 %v879
  %v888 = vunpack.c.l.b16 %v880
  %v889 = vunpack.c.l.b16 %v881
  %v890 = vunpack.c.l.b16 %v882
  %v891 = vpack.c.b16 %v888, %v887
  %v892 = vpack.c.b16 %v890, %v889
  %895 = vmatprep.subr.bf16.mxu0 0
  %896 = vmatpush1.bf16.msra.mxu0 0
  %897 = vmatprep.subr.bf16.mxu0 0
  %898 = vmatpush1.bf16.msra.mxu0 0
  %899 = vmatprep.subr.bf16.mxu0 0
  %900 = vmatpush1.bf16.msra.mxu0 0
  %901 = vmatprep.subr.bf16.mxu0 0
  %902 = vmatpush1.bf16.msra.mxu0 0
  %903 = vmatprep.subr.bf16.mxu0 0
  %904 = vmatpush1.bf16.msra.mxu0 0
  %905 = vmatprep.subr.bf16.mxu0 0
  %906 = vmatpush1.bf16.msra.mxu0 0
  %907 = vmatprep.subr.bf16.mxu0 0
  %908 = vmatpush1.bf16.msra.mxu0 %v892
  %909 = vmatprep.subr.bf16.mxu0 0
  %910 = vmatpush1.bf16.msra.mxu0 %v891
  %911 = vmatprep.subr.bf16.mxu0 0
  %912 = vmatpush2.bf16.msra.mxu0 0
  %913 = vmatprep.subr.bf16.mxu0 0
  %914 = vmatpush2.bf16.msra.mxu0 0
  %915 = vmatprep.subr.bf16.mxu0 0
  %916 = vmatpush2.bf16.msra.mxu0 0
  %917 = vmatprep.subr.bf16.mxu0 0
  %918 = vmatpush2.bf16.msra.mxu0 0
  %919 = vmatprep.subr.bf16.mxu0 0
  %920 = vmatpush2.bf16.msra.mxu0 0
  %921 = vmatprep.subr.bf16.mxu0 0
  %922 = vmatpush2.bf16.msra.mxu0 0
  %923 = vmatprep.subr.bf16.mxu0 0
  %924 = vmatpush2.bf16.msra.mxu0 0
  %925 = vmatprep.subr.bf16.mxu0 0
  %926 = vmatpush2.bf16.msra.mxu0 0
  %927 = vmatprep.mubr.bf16.mxu0 0
  %928 = vmatmul.mubr.bf16.gmra.mxu0 %v837
  %v929 = vpop.f32.mrf.mxu0
  %v930 = vadd.f32 0.0, %v929
  %v931 = vpop.f32.mrf.mxu0
  %v932 = vpop.f32.mrf.mxu0
  %v933 = vpop.f32.mrf.mxu0
  %934 = vdwg.mxu0
  %v935 = vld [vmem:[%s136] sm:$0xf]
  %v936 = vld [vmem:[%s136 + $0x4] sm:$0xf]
  %v937 = vld [vmem:[%s136 + $0x8] sm:$0xf]
  %v938 = vld [vmem:[%s136 + $0xc] sm:$0xf]
  %v939 = vadd.f32 %v816, %v874
  %v940 = vxor.u32 %v939, 2147483648
  %v941 = vmul.f32 %v940, 1.442695
  %v942 = vpow.pop %v941
  %v943 = vadd.f32 %v942, 1.0
  %v944 = vrcp.pop %v943
  %v945 = vmul.f32 1.0, %v944
  %v946 = vadd.f32 %v817, %v930
  %v947 = vxor.u32 %v946, 2147483648
  %v948 = vmul.f32 %v947, 1.442695
  %v949 = vpow.pop %v948
  %v950 = vadd.f32 %v949, 1.0
  %v951 = vrcp.pop %v950
  %v952 = vmul.f32 1.0, %v951
  %v957 = vunpack.c.l.b16 %v935
  %v958 = vunpack.c.l.b16 %v936
  %v959 = vunpack.c.l.b16 %v937
  %v960 = vunpack.c.l.b16 %v938
  %v961 = vpack.c.b16 %v958, %v957
  %v962 = vpack.c.b16 %v960, %v959
  %965 = vmatprep.subr.bf16.mxu0 0
  %966 = vmatpush1.bf16.msra.mxu0 0
  %967 = vmatprep.subr.bf16.mxu0 0
  %968 = vmatpush1.bf16.msra.mxu0 0
  %969 = vmatprep.subr.bf16.mxu0 0
  %970 = vmatpush1.bf16.msra.mxu0 0
  %971 = vmatprep.subr.bf16.mxu0 0
  %972 = vmatpush1.bf16.msra.mxu0 0
  %973 = vmatprep.subr.bf16.mxu0 0
  %974 = vmatpush1.bf16.msra.mxu0 0
  %975 = vmatprep.subr.bf16.mxu0 0
  %976 = vmatpush1.bf16.msra.mxu0 0
  %977 = vmatprep.subr.bf16.mxu0 0
  %978 = vmatpush1.bf16.msra.mxu0 %v962
  %979 = vmatprep.subr.bf16.mxu0 0
  %980 = vmatpush1.bf16.msra.mxu0 %v961
  %981 = vmatprep.subr.bf16.mxu0 0
  %982 = vmatpush2.bf16.msra.mxu0 0
  %983 = vmatprep.subr.bf16.mxu0 0
  %984 = vmatpush2.bf16.msra.mxu0 0
  %985 = vmatprep.subr.bf16.mxu0 0
  %986 = vmatpush2.bf16.msra.mxu0 0
  %987 = vmatprep.subr.bf16.mxu0 0
  %988 = vmatpush2.bf16.msra.mxu0 0
  %989 = vmatprep.subr.bf16.mxu0 0
  %990 = vmatpush2.bf16.msra.mxu0 0
  %991 = vmatprep.subr.bf16.mxu0 0
  %992 = vmatpush2.bf16.msra.mxu0 0
  %993 = vmatprep.subr.bf16.mxu0 0
  %994 = vmatpush2.bf16.msra.mxu0 0
  %995 = vmatprep.subr.bf16.mxu0 0
  %996 = vmatpush2.bf16.msra.mxu0 0
  %997 = vmatprep.mubr.bf16.mxu0 0
  %998 = vmatmul.mubr.bf16.gmra.mxu0 %v837
  %v999 = vpop.f32.mrf.mxu0
  %v1000 = vadd.f32 %v159, %v999
  %v1001 = vpop.f32.mrf.mxu0
  %v1002 = vpop.f32.mrf.mxu0
  %v1003 = vpop.f32.mrf.mxu0
  %1004 = vdwg.mxu0
  %v1005 = vmul.f32 %v945, %v1000
  %v1006 = vadd.f32 %v818, %v1005
  %v1007 = vtanh.pop %v1006
  %v1008 = vsub.f32 %v812, %v1007
  %v1009 = vmul.f32 %v952, %v1008
  %v1010 = vadd.f32 %v1007, %v1009
  %s1011 = scalar_lea.vmem %s3, 8
  %1012 = vst.msk [vmem:[%s1011] sm:$0x3] %vm219, %v1010
  %s1013 = scalar_lea.vmem %s0, 30
  %v1014 = vld [vmem:[%s1013] sm:$0x3]
  %v1015 = vld [vmem:[%s1013 + $0x2] sm:$0x3]
  %v1016 = vld [vmem:[%s1013 + $0x4] sm:$0x3]
  %v1017 = vpack.c.bf16 %v1010, %v1010
  %v1018 = vld [vmem:[%s1] sm:$0xf]
  %v1019 = vld [vmem:[%s1 + $0x4] sm:$0xf]
  %v1020 = vld [vmem:[%s1 + $0x8] sm:$0xf]
  %v1021 = vld [vmem:[%s1 + $0xc] sm:$0xf]
  %v1026 = vunpack.c.l.b16 %v1018
  %v1027 = vunpack.c.l.b16 %v1019
  %v1028 = vunpack.c.l.b16 %v1020
  %v1029 = vunpack.c.l.b16 %v1021
  %v1030 = vpack.c.b16 %v1027, %v1026
  %v1031 = vpack.c.b16 %v1029, %v1028
  %v1035 = vsel %vm35, %v1017, 0
  %1037 = vmatprep.subr.bf16.mxu0 0
  %1038 = vmatpush1.bf16.msra.mxu0 0
  %1039 = vmatprep.subr.bf16.mxu0 0
  %1040 = vmatpush1.bf16.msra.mxu0 0
  %1041 = vmatprep.subr.bf16.mxu0 0
  %1042 = vmatpush1.bf16.msra.mxu0 0
  %1043 = vmatprep.subr.bf16.mxu0 0
  %1044 = vmatpush1.bf16.msra.mxu0 0
  %1045 = vmatprep.subr.bf16.mxu0 0
  %1046 = vmatpush1.bf16.msra.mxu0 0
  %1047 = vmatprep.subr.bf16.mxu0 0
  %1048 = vmatpush1.bf16.msra.mxu0 0
  %1049 = vmatprep.subr.bf16.mxu0 0
  %1050 = vmatpush1.bf16.msra.mxu0 %v1031
  %1051 = vmatprep.subr.bf16.mxu0 0
  %1052 = vmatpush1.bf16.msra.mxu0 %v1030
  %1053 = vmatprep.subr.bf16.mxu0 0
  %1054 = vmatpush2.bf16.msra.mxu0 0
  %1055 = vmatprep.subr.bf16.mxu0 0
  %1056 = vmatpush2.bf16.msra.mxu0 0
  %1057 = vmatprep.subr.bf16.mxu0 0
  %1058 = vmatpush2.bf16.msra.mxu0 0
  %1059 = vmatprep.subr.bf16.mxu0 0
  %1060 = vmatpush2.bf16.msra.mxu0 0
  %1061 = vmatprep.subr.bf16.mxu0 0
  %1062 = vmatpush2.bf16.msra.mxu0 0
  %1063 = vmatprep.subr.bf16.mxu0 0
  %1064 = vmatpush2.bf16.msra.mxu0 0
  %1065 = vmatprep.subr.bf16.mxu0 0
  %1066 = vmatpush2.bf16.msra.mxu0 0
  %1067 = vmatprep.subr.bf16.mxu0 0
  %1068 = vmatpush2.bf16.msra.mxu0 0
  %1069 = vmatprep.mubr.bf16.mxu0 0
  %1070 = vmatmul.mubr.bf16.gmra.mxu0 %v1035
  %v1071 = vpop.f32.mrf.mxu0
  %v1072 = vadd.f32 0.0, %v1071
  %v1073 = vpop.f32.mrf.mxu0
  %v1074 = vpop.f32.mrf.mxu0
  %v1075 = vpop.f32.mrf.mxu0
  %1076 = vdwg.mxu0
  %v1077 = vld [vmem:[%s79] sm:$0xf]
  %v1078 = vld [vmem:[%s79 + $0x4] sm:$0xf]
  %v1079 = vld [vmem:[%s79 + $0x8] sm:$0xf]
  %v1080 = vld [vmem:[%s79 + $0xc] sm:$0xf]
  %v1085 = vunpack.c.l.b16 %v1077
  %v1086 = vunpack.c.l.b16 %v1078
  %v1087 = vunpack.c.l.b16 %v1079
  %v1088 = vunpack.c.l.b16 %v1080
  %v1089 = vpack.c.b16 %v1086, %v1085
  %v1090 = vpack.c.b16 %v1088, %v1087
  %1093 = vmatprep.subr.bf16.mxu0 0
  %1094 = vmatpush1.bf16.msra.mxu0 0
  %1095 = vmatprep.subr.bf16.mxu0 0
  %1096 = vmatpush1.bf16.msra.mxu0 0
  %1097 = vmatprep.subr.bf16.mxu0 0
  %1098 = vmatpush1.bf16.msra.mxu0 0
  %1099 = vmatprep.subr.bf16.mxu0 0
  %1100 = vmatpush1.bf16.msra.mxu0 0
  %1101 = vmatprep.subr.bf16.mxu0 0
  %1102 = vmatpush1.bf16.msra.mxu0 0
  %1103 = vmatprep.subr.bf16.mxu0 0
  %1104 = vmatpush1.bf16.msra.mxu0 0
  %1105 = vmatprep.subr.bf16.mxu0 0
  %1106 = vmatpush1.bf16.msra.mxu0 %v1090
  %1107 = vmatprep.subr.bf16.mxu0 0
  %1108 = vmatpush1.bf16.msra.mxu0 %v1089
  %1109 = vmatprep.subr.bf16.mxu0 0
  %1110 = vmatpush2.bf16.msra.mxu0 0
  %1111 = vmatprep.subr.bf16.mxu0 0
  %1112 = vmatpush2.bf16.msra.mxu0 0
  %1113 = vmatprep.subr.bf16.mxu0 0
  %1114 = vmatpush2.bf16.msra.mxu0 0
  %1115 = vmatprep.subr.bf16.mxu0 0
  %1116 = vmatpush2.bf16.msra.mxu0 0
  %1117 = vmatprep.subr.bf16.mxu0 0
  %1118 = vmatpush2.bf16.msra.mxu0 0
  %1119 = vmatprep.subr.bf16.mxu0 0
  %1120 = vmatpush2.bf16.msra.mxu0 0
  %1121 = vmatprep.subr.bf16.mxu0 0
  %1122 = vmatpush2.bf16.msra.mxu0 0
  %1123 = vmatprep.subr.bf16.mxu0 0
  %1124 = vmatpush2.bf16.msra.mxu0 0
  %1125 = vmatprep.mubr.bf16.mxu0 0
  %1126 = vmatmul.mubr.bf16.gmra.mxu0 %v1035
  %v1127 = vpop.f32.mrf.mxu0
  %v1128 = vadd.f32 0.0, %v1127
  %v1129 = vpop.f32.mrf.mxu0
  %v1130 = vpop.f32.mrf.mxu0
  %v1131 = vpop.f32.mrf.mxu0
  %1132 = vdwg.mxu0
  %v1133 = vld [vmem:[%s136] sm:$0xf]
  %v1134 = vld [vmem:[%s136 + $0x4] sm:$0xf]
  %v1135 = vld [vmem:[%s136 + $0x8] sm:$0xf]
  %v1136 = vld [vmem:[%s136 + $0xc] sm:$0xf]
  %v1137 = vadd.f32 %v1014, %v1072
  %v1138 = vxor.u32 %v1137, 2147483648
  %v1139 = vmul.f32 %v1138, 1.442695
  %v1140 = vpow.pop %v1139
  %v1141 = vadd.f32 %v1140, 1.0
  %v1142 = vrcp.pop %v1141
  %v1143 = vmul.f32 1.0, %v1142
  %v1144 = vadd.f32 %v1015, %v1128
  %v1145 = vxor.u32 %v1144, 2147483648
  %v1146 = vmul.f32 %v1145, 1.442695
  %v1147 = vpow.pop %v1146
  %v1148 = vadd.f32 %v1147, 1.0
  %v1149 = vrcp.pop %v1148
  %v1150 = vmul.f32 1.0, %v1149
  %v1155 = vunpack.c.l.b16 %v1133
  %v1156 = vunpack.c.l.b16 %v1134
  %v1157 = vunpack.c.l.b16 %v1135
  %v1158 = vunpack.c.l.b16 %v1136
  %v1159 = vpack.c.b16 %v1156, %v1155
  %v1160 = vpack.c.b16 %v1158, %v1157
  %1163 = vmatprep.subr.bf16.mxu0 0
  %1164 = vmatpush1.bf16.msra.mxu0 0
  %1165 = vmatprep.subr.bf16.mxu0 0
  %1166 = vmatpush1.bf16.msra.mxu0 0
  %1167 = vmatprep.subr.bf16.mxu0 0
  %1168 = vmatpush1.bf16.msra.mxu0 0
  %1169 = vmatprep.subr.bf16.mxu0 0
  %1170 = vmatpush1.bf16.msra.mxu0 0
  %1171 = vmatprep.subr.bf16.mxu0 0
  %1172 = vmatpush1.bf16.msra.mxu0 0
  %1173 = vmatprep.subr.bf16.mxu0 0
  %1174 = vmatpush1.bf16.msra.mxu0 0
  %1175 = vmatprep.subr.bf16.mxu0 0
  %1176 = vmatpush1.bf16.msra.mxu0 %v1160
  %1177 = vmatprep.subr.bf16.mxu0 0
  %1178 = vmatpush1.bf16.msra.mxu0 %v1159
  %1179 = vmatprep.subr.bf16.mxu0 0
  %1180 = vmatpush2.bf16.msra.mxu0 0
  %1181 = vmatprep.subr.bf16.mxu0 0
  %1182 = vmatpush2.bf16.msra.mxu0 0
  %1183 = vmatprep.subr.bf16.mxu0 0
  %1184 = vmatpush2.bf16.msra.mxu0 0
  %1185 = vmatprep.subr.bf16.mxu0 0
  %1186 = vmatpush2.bf16.msra.mxu0 0
  %1187 = vmatprep.subr.bf16.mxu0 0
  %1188 = vmatpush2.bf16.msra.mxu0 0
  %1189 = vmatprep.subr.bf16.mxu0 0
  %1190 = vmatpush2.bf16.msra.mxu0 0
  %1191 = vmatprep.subr.bf16.mxu0 0
  %1192 = vmatpush2.bf16.msra.mxu0 0
  %1193 = vmatprep.subr.bf16.mxu0 0
  %1194 = vmatpush2.bf16.msra.mxu0 0
  %1195 = vmatprep.mubr.bf16.mxu0 0
  %1196 = vmatmul.mubr.bf16.gmra.mxu0 %v1035
  %v1197 = vpop.f32.mrf.mxu0
  %v1198 = vadd.f32 %v159, %v1197
  %v1199 = vpop.f32.mrf.mxu0
  %v1200 = vpop.f32.mrf.mxu0
  %v1201 = vpop.f32.mrf.mxu0
  %1202 = vdwg.mxu0
  %v1203 = vmul.f32 %v1143, %v1198
  %v1204 = vadd.f32 %v1016, %v1203
  %v1205 = vtanh.pop %v1204
  %v1206 = vsub.f32 %v1010, %v1205
  %v1207 = vmul.f32 %v1150, %v1206
  %v1208 = vadd.f32 %v1205, %v1207
  %s1209 = scalar_lea.vmem %s3, 10
  %1210 = vst.msk [vmem:[%s1209] sm:$0x3] %vm219, %v1208
  %s1211 = scalar_lea.vmem %s0, 36
  %v1212 = vld [vmem:[%s1211] sm:$0x3]
  %v1213 = vld [vmem:[%s1211 + $0x2] sm:$0x3]
  %v1214 = vld [vmem:[%s1211 + $0x4] sm:$0x3]
  %v1215 = vpack.c.bf16 %v1208, %v1208
  %v1216 = vld [vmem:[%s1] sm:$0xf]
  %v1217 = vld [vmem:[%s1 + $0x4] sm:$0xf]
  %v1218 = vld [vmem:[%s1 + $0x8] sm:$0xf]
  %v1219 = vld [vmem:[%s1 + $0xc] sm:$0xf]
  %v1224 = vunpack.c.l.b16 %v1216
  %v1225 = vunpack.c.l.b16 %v1217
  %v1226 = vunpack.c.l.b16 %v1218
  %v1227 = vunpack.c.l.b16 %v1219
  %v1228 = vpack.c.b16 %v1225, %v1224
  %v1229 = vpack.c.b16 %v1227, %v1226
  %v1233 = vsel %vm35, %v1215, 0
  %1235 = vmatprep.subr.bf16.mxu0 0
  %1236 = vmatpush1.bf16.msra.mxu0 0
  %1237 = vmatprep.subr.bf16.mxu0 0
  %1238 = vmatpush1.bf16.msra.mxu0 0
  %1239 = vmatprep.subr.bf16.mxu0 0
  %1240 = vmatpush1.bf16.msra.mxu0 0
  %1241 = vmatprep.subr.bf16.mxu0 0
  %1242 = vmatpush1.bf16.msra.mxu0 0
  %1243 = vmatprep.subr.bf16.mxu0 0
  %1244 = vmatpush1.bf16.msra.mxu0 0
  %1245 = vmatprep.subr.bf16.mxu0 0
  %1246 = vmatpush1.bf16.msra.mxu0 0
  %1247 = vmatprep.subr.bf16.mxu0 0
  %1248 = vmatpush1.bf16.msra.mxu0 %v1229
  %1249 = vmatprep.subr.bf16.mxu0 0
  %1250 = vmatpush1.bf16.msra.mxu0 %v1228
  %1251 = vmatprep.subr.bf16.mxu0 0
  %1252 = vmatpush2.bf16.msra.mxu0 0
  %1253 = vmatprep.subr.bf16.mxu0 0
  %1254 = vmatpush2.bf16.msra.mxu0 0
  %1255 = vmatprep.subr.bf16.mxu0 0
  %1256 = vmatpush2.bf16.msra.mxu0 0
  %1257 = vmatprep.subr.bf16.mxu0 0
  %1258 = vmatpush2.bf16.msra.mxu0 0
  %1259 = vmatprep.subr.bf16.mxu0 0
  %1260 = vmatpush2.bf16.msra.mxu0 0
  %1261 = vmatprep.subr.bf16.mxu0 0
  %1262 = vmatpush2.bf16.msra.mxu0 0
  %1263 = vmatprep.subr.bf16.mxu0 0
  %1264 = vmatpush2.bf16.msra.mxu0 0
  %1265 = vmatprep.subr.bf16.mxu0 0
  %1266 = vmatpush2.bf16.msra.mxu0 0
  %1267 = vmatprep.mubr.bf16.mxu0 0
  %1268 = vmatmul.mubr.bf16.gmra.mxu0 %v1233
  %v1269 = vpop.f32.mrf.mxu0
  %v1270 = vadd.f32 0.0, %v1269
  %v1271 = vpop.f32.mrf.mxu0
  %v1272 = vpop.f32.mrf.mxu0
  %v1273 = vpop.f32.mrf.mxu0
  %1274 = vdwg.mxu0
  %v1275 = vld [vmem:[%s79] sm:$0xf]
  %v1276 = vld [vmem:[%s79 + $0x4] sm:$0xf]
  %v1277 = vld [vmem:[%s79 + $0x8] sm:$0xf]
  %v1278 = vld [vmem:[%s79 + $0xc] sm:$0xf]
  %v1283 = vunpack.c.l.b16 %v1275
  %v1284 = vunpack.c.l.b16 %v1276
  %v1285 = vunpack.c.l.b16 %v1277
  %v1286 = vunpack.c.l.b16 %v1278
  %v1287 = vpack.c.b16 %v1284, %v1283
  %v1288 = vpack.c.b16 %v1286, %v1285
  %1291 = vmatprep.subr.bf16.mxu0 0
  %1292 = vmatpush1.bf16.msra.mxu0 0
  %1293 = vmatprep.subr.bf16.mxu0 0
  %1294 = vmatpush1.bf16.msra.mxu0 0
  %1295 = vmatprep.subr.bf16.mxu0 0
  %1296 = vmatpush1.bf16.msra.mxu0 0
  %1297 = vmatprep.subr.bf16.mxu0 0
  %1298 = vmatpush1.bf16.msra.mxu0 0
  %1299 = vmatprep.subr.bf16.mxu0 0
  %1300 = vmatpush1.bf16.msra.mxu0 0
  %1301 = vmatprep.subr.bf16.mxu0 0
  %1302 = vmatpush1.bf16.msra.mxu0 0
  %1303 = vmatprep.subr.bf16.mxu0 0
  %1304 = vmatpush1.bf16.msra.mxu0 %v1288
  %1305 = vmatprep.subr.bf16.mxu0 0
  %1306 = vmatpush1.bf16.msra.mxu0 %v1287
  %1307 = vmatprep.subr.bf16.mxu0 0
  %1308 = vmatpush2.bf16.msra.mxu0 0
  %1309 = vmatprep.subr.bf16.mxu0 0
  %1310 = vmatpush2.bf16.msra.mxu0 0
  %1311 = vmatprep.subr.bf16.mxu0 0
  %1312 = vmatpush2.bf16.msra.mxu0 0
  %1313 = vmatprep.subr.bf16.mxu0 0
  %1314 = vmatpush2.bf16.msra.mxu0 0
  %1315 = vmatprep.subr.bf16.mxu0 0
  %1316 = vmatpush2.bf16.msra.mxu0 0
  %1317 = vmatprep.subr.bf16.mxu0 0
  %1318 = vmatpush2.bf16.msra.mxu0 0
  %1319 = vmatprep.subr.bf16.mxu0 0
  %1320 = vmatpush2.bf16.msra.mxu0 0
  %1321 = vmatprep.subr.bf16.mxu0 0
  %1322 = vmatpush2.bf16.msra.mxu0 0
  %1323 = vmatprep.mubr.bf16.mxu0 0
  %1324 = vmatmul.mubr.bf16.gmra.mxu0 %v1233
  %v1325 = vpop.f32.mrf.mxu0
  %v1326 = vadd.f32 0.0, %v1325
  %v1327 = vpop.f32.mrf.mxu0
  %v1328 = vpop.f32.mrf.mxu0
  %v1329 = vpop.f32.mrf.mxu0
  %1330 = vdwg.mxu0
  %v1331 = vld [vmem:[%s136] sm:$0xf]
  %v1332 = vld [vmem:[%s136 + $0x4] sm:$0xf]
  %v1333 = vld [vmem:[%s136 + $0x8] sm:$0xf]
  %v1334 = vld [vmem:[%s136 + $0xc] sm:$0xf]
  %v1335 = vadd.f32 %v1212, %v1270
  %v1336 = vxor.u32 %v1335, 2147483648
  %v1337 = vmul.f32 %v1336, 1.442695
  %v1338 = vpow.pop %v1337
  %v1339 = vadd.f32 %v1338, 1.0
  %v1340 = vrcp.pop %v1339
  %v1341 = vmul.f32 1.0, %v1340
  %v1342 = vadd.f32 %v1213, %v1326
  %v1343 = vxor.u32 %v1342, 2147483648
  %v1344 = vmul.f32 %v1343, 1.442695
  %v1345 = vpow.pop %v1344
  %v1346 = vadd.f32 %v1345, 1.0
  %v1347 = vrcp.pop %v1346
  %v1348 = vmul.f32 1.0, %v1347
  %v1353 = vunpack.c.l.b16 %v1331
  %v1354 = vunpack.c.l.b16 %v1332
  %v1355 = vunpack.c.l.b16 %v1333
  %v1356 = vunpack.c.l.b16 %v1334
  %v1357 = vpack.c.b16 %v1354, %v1353
  %v1358 = vpack.c.b16 %v1356, %v1355
  %1361 = vmatprep.subr.bf16.mxu0 0
  %1362 = vmatpush1.bf16.msra.mxu0 0
  %1363 = vmatprep.subr.bf16.mxu0 0
  %1364 = vmatpush1.bf16.msra.mxu0 0
  %1365 = vmatprep.subr.bf16.mxu0 0
  %1366 = vmatpush1.bf16.msra.mxu0 0
  %1367 = vmatprep.subr.bf16.mxu0 0
  %1368 = vmatpush1.bf16.msra.mxu0 0
  %1369 = vmatprep.subr.bf16.mxu0 0
  %1370 = vmatpush1.bf16.msra.mxu0 0
  %1371 = vmatprep.subr.bf16.mxu0 0
  %1372 = vmatpush1.bf16.msra.mxu0 0
  %1373 = vmatprep.subr.bf16.mxu0 0
  %1374 = vmatpush1.bf16.msra.mxu0 %v1358
  %1375 = vmatprep.subr.bf16.mxu0 0
  %1376 = vmatpush1.bf16.msra.mxu0 %v1357
  %1377 = vmatprep.subr.bf16.mxu0 0
  %1378 = vmatpush2.bf16.msra.mxu0 0
  %1379 = vmatprep.subr.bf16.mxu0 0
  %1380 = vmatpush2.bf16.msra.mxu0 0
  %1381 = vmatprep.subr.bf16.mxu0 0
  %1382 = vmatpush2.bf16.msra.mxu0 0
  %1383 = vmatprep.subr.bf16.mxu0 0
  %1384 = vmatpush2.bf16.msra.mxu0 0
  %1385 = vmatprep.subr.bf16.mxu0 0
  %1386 = vmatpush2.bf16.msra.mxu0 0
  %1387 = vmatprep.subr.bf16.mxu0 0
  %1388 = vmatpush2.bf16.msra.mxu0 0
  %1389 = vmatprep.subr.bf16.mxu0 0
  %1390 = vmatpush2.bf16.msra.mxu0 0
  %1391 = vmatprep.subr.bf16.mxu0 0
  %1392 = vmatpush2.bf16.msra.mxu0 0
  %1393 = vmatprep.mubr.bf16.mxu0 0
  %1394 = vmatmul.mubr.bf16.gmra.mxu0 %v1233
  %v1395 = vpop.f32.mrf.mxu0
  %v1396 = vadd.f32 %v159, %v1395
  %v1397 = vpop.f32.mrf.mxu0
  %v1398 = vpop.f32.mrf.mxu0
  %v1399 = vpop.f32.mrf.mxu0
  %1400 = vdwg.mxu0
  %v1401 = vmul.f32 %v1341, %v1396
  %v1402 = vadd.f32 %v1214, %v1401
  %v1403 = vtanh.pop %v1402
  %v1404 = vsub.f32 %v1208, %v1403
  %v1405 = vmul.f32 %v1348, %v1404
  %v1406 = vadd.f32 %v1403, %v1405
  %s1407 = scalar_lea.vmem %s3, 12
  %1408 = vst.msk [vmem:[%s1407] sm:$0x3] %vm219, %v1406
  %s1409 = scalar_lea.vmem %s0, 42
  %v1410 = vld [vmem:[%s1409] sm:$0x3]
  %v1411 = vld [vmem:[%s1409 + $0x2] sm:$0x3]
  %v1412 = vld [vmem:[%s1409 + $0x4] sm:$0x3]
  %v1413 = vpack.c.bf16 %v1406, %v1406
  %v1414 = vld [vmem:[%s1] sm:$0xf]
  %v1415 = vld [vmem:[%s1 + $0x4] sm:$0xf]
  %v1416 = vld [vmem:[%s1 + $0x8] sm:$0xf]
  %v1417 = vld [vmem:[%s1 + $0xc] sm:$0xf]
  %v1422 = vunpack.c.l.b16 %v1414
  %v1423 = vunpack.c.l.b16 %v1415
  %v1424 = vunpack.c.l.b16 %v1416
  %v1425 = vunpack.c.l.b16 %v1417
  %v1426 = vpack.c.b16 %v1423, %v1422
  %v1427 = vpack.c.b16 %v1425, %v1424
  %v1431 = vsel %vm35, %v1413, 0
  %1433 = vmatprep.subr.bf16.mxu0 0
  %1434 = vmatpush1.bf16.msra.mxu0 0
  %1435 = vmatprep.subr.bf16.mxu0 0
  %1436 = vmatpush1.bf16.msra.mxu0 0
  %1437 = vmatprep.subr.bf16.mxu0 0
  %1438 = vmatpush1.bf16.msra.mxu0 0
  %1439 = vmatprep.subr.bf16.mxu0 0
  %1440 = vmatpush1.bf16.msra.mxu0 0
  %1441 = vmatprep.subr.bf16.mxu0 0
  %1442 = vmatpush1.bf16.msra.mxu0 0
  %1443 = vmatprep.subr.bf16.mxu0 0
  %1444 = vmatpush1.bf16.msra.mxu0 0
  %1445 = vmatprep.subr.bf16.mxu0 0
  %1446 = vmatpush1.bf16.msra.mxu0 %v1427
  %1447 = vmatprep.subr.bf16.mxu0 0
  %1448 = vmatpush1.bf16.msra.mxu0 %v1426
  %1449 = vmatprep.subr.bf16.mxu0 0
  %1450 = vmatpush2.bf16.msra.mxu0 0
  %1451 = vmatprep.subr.bf16.mxu0 0
  %1452 = vmatpush2.bf16.msra.mxu0 0
  %1453 = vmatprep.subr.bf16.mxu0 0
  %1454 = vmatpush2.bf16.msra.mxu0 0
  %1455 = vmatprep.subr.bf16.mxu0 0
  %1456 = vmatpush2.bf16.msra.mxu0 0
  %1457 = vmatprep.subr.bf16.mxu0 0
  %1458 = vmatpush2.bf16.msra.mxu0 0
  %1459 = vmatprep.subr.bf16.mxu0 0
  %1460 = vmatpush2.bf16.msra.mxu0 0
  %1461 = vmatprep.subr.bf16.mxu0 0
  %1462 = vmatpush2.bf16.msra.mxu0 0
  %1463 = vmatprep.subr.bf16.mxu0 0
  %1464 = vmatpush2.bf16.msra.mxu0 0
  %1465 = vmatprep.mubr.bf16.mxu0 0
  %1466 = vmatmul.mubr.bf16.gmra.mxu0 %v1431
  %v1467 = vpop.f32.mrf.mxu0
  %v1468 = vadd.f32 0.0, %v1467
  %v1469 = vpop.f32.mrf.mxu0
  %v1470 = vpop.f32.mrf.mxu0
  %v1471 = vpop.f32.mrf.mxu0
  %1472 = vdwg.mxu0
  %v1473 = vld [vmem:[%s79] sm:$0xf]
  %v1474 = vld [vmem:[%s79 + $0x4] sm:$0xf]
  %v1475 = vld [vmem:[%s79 + $0x8] sm:$0xf]
  %v1476 = vld [vmem:[%s79 + $0xc] sm:$0xf]
  %v1481 = vunpack.c.l.b16 %v1473
  %v1482 = vunpack.c.l.b16 %v1474
  %v1483 = vunpack.c.l.b16 %v1475
  %v1484 = vunpack.c.l.b16 %v1476
  %v1485 = vpack.c.b16 %v1482, %v1481
  %v1486 = vpack.c.b16 %v1484, %v1483
  %1489 = vmatprep.subr.bf16.mxu0 0
  %1490 = vmatpush1.bf16.msra.mxu0 0
  %1491 = vmatprep.subr.bf16.mxu0 0
  %1492 = vmatpush1.bf16.msra.mxu0 0
  %1493 = vmatprep.subr.bf16.mxu0 0
  %1494 = vmatpush1.bf16.msra.mxu0 0
  %1495 = vmatprep.subr.bf16.mxu0 0
  %1496 = vmatpush1.bf16.msra.mxu0 0
  %1497 = vmatprep.subr.bf16.mxu0 0
  %1498 = vmatpush1.bf16.msra.mxu0 0
  %1499 = vmatprep.subr.bf16.mxu0 0
  %1500 = vmatpush1.bf16.msra.mxu0 0
  %1501 = vmatprep.subr.bf16.mxu0 0
  %1502 = vmatpush1.bf16.msra.mxu0 %v1486
  %1503 = vmatprep.subr.bf16.mxu0 0
  %1504 = vmatpush1.bf16.msra.mxu0 %v1485
  %1505 = vmatprep.subr.bf16.mxu0 0
  %1506 = vmatpush2.bf16.msra.mxu0 0
  %1507 = vmatprep.subr.bf16.mxu0 0
  %1508 = vmatpush2.bf16.msra.mxu0 0
  %1509 = vmatprep.subr.bf16.mxu0 0
  %1510 = vmatpush2.bf16.msra.mxu0 0
  %1511 = vmatprep.subr.bf16.mxu0 0
  %1512 = vmatpush2.bf16.msra.mxu0 0
  %1513 = vmatprep.subr.bf16.mxu0 0
  %1514 = vmatpush2.bf16.msra.mxu0 0
  %1515 = vmatprep.subr.bf16.mxu0 0
  %1516 = vmatpush2.bf16.msra.mxu0 0
  %1517 = vmatprep.subr.bf16.mxu0 0
  %1518 = vmatpush2.bf16.msra.mxu0 0
  %1519 = vmatprep.subr.bf16.mxu0 0
  %1520 = vmatpush2.bf16.msra.mxu0 0
  %1521 = vmatprep.mubr.bf16.mxu0 0
  %1522 = vmatmul.mubr.bf16.gmra.mxu0 %v1431
  %v1523 = vpop.f32.mrf.mxu0
  %v1524 = vadd.f32 0.0, %v1523
  %v1525 = vpop.f32.mrf.mxu0
  %v1526 = vpop.f32.mrf.mxu0
  %v1527 = vpop.f32.mrf.mxu0
  %1528 = vdwg.mxu0
  %v1529 = vld [vmem:[%s136] sm:$0xf]
  %v1530 = vld [vmem:[%s136 + $0x4] sm:$0xf]
  %v1531 = vld [vmem:[%s136 + $0x8] sm:$0xf]
  %v1532 = vld [vmem:[%s136 + $0xc] sm:$0xf]
  %v1533 = vadd.f32 %v1410, %v1468
  %v1534 = vxor.u32 %v1533, 2147483648
  %v1535 = vmul.f32 %v1534, 1.442695
  %v1536 = vpow.pop %v1535
  %v1537 = vadd.f32 %v1536, 1.0
  %v1538 = vrcp.pop %v1537
  %v1539 = vmul.f32 1.0, %v1538
  %v1540 = vadd.f32 %v1411, %v1524
  %v1541 = vxor.u32 %v1540, 2147483648
  %v1542 = vmul.f32 %v1541, 1.442695
  %v1543 = vpow.pop %v1542
  %v1544 = vadd.f32 %v1543, 1.0
  %v1545 = vrcp.pop %v1544
  %v1546 = vmul.f32 1.0, %v1545
  %v1551 = vunpack.c.l.b16 %v1529
  %v1552 = vunpack.c.l.b16 %v1530
  %v1553 = vunpack.c.l.b16 %v1531
  %v1554 = vunpack.c.l.b16 %v1532
  %v1555 = vpack.c.b16 %v1552, %v1551
  %v1556 = vpack.c.b16 %v1554, %v1553
  %1559 = vmatprep.subr.bf16.mxu0 0
  %1560 = vmatpush1.bf16.msra.mxu0 0
  %1561 = vmatprep.subr.bf16.mxu0 0
  %1562 = vmatpush1.bf16.msra.mxu0 0
  %1563 = vmatprep.subr.bf16.mxu0 0
  %1564 = vmatpush1.bf16.msra.mxu0 0
  %1565 = vmatprep.subr.bf16.mxu0 0
  %1566 = vmatpush1.bf16.msra.mxu0 0
  %1567 = vmatprep.subr.bf16.mxu0 0
  %1568 = vmatpush1.bf16.msra.mxu0 0
  %1569 = vmatprep.subr.bf16.mxu0 0
  %1570 = vmatpush1.bf16.msra.mxu0 0
  %1571 = vmatprep.subr.bf16.mxu0 0
  %1572 = vmatpush1.bf16.msra.mxu0 %v1556
  %1573 = vmatprep.subr.bf16.mxu0 0
  %1574 = vmatpush1.bf16.msra.mxu0 %v1555
  %1575 = vmatprep.subr.bf16.mxu0 0
  %1576 = vmatpush2.bf16.msra.mxu0 0
  %1577 = vmatprep.subr.bf16.mxu0 0
  %1578 = vmatpush2.bf16.msra.mxu0 0
  %1579 = vmatprep.subr.bf16.mxu0 0
  %1580 = vmatpush2.bf16.msra.mxu0 0
  %1581 = vmatprep.subr.bf16.mxu0 0
  %1582 = vmatpush2.bf16.msra.mxu0 0
  %1583 = vmatprep.subr.bf16.mxu0 0
  %1584 = vmatpush2.bf16.msra.mxu0 0
  %1585 = vmatprep.subr.bf16.mxu0 0
  %1586 = vmatpush2.bf16.msra.mxu0 0
  %1587 = vmatprep.subr.bf16.mxu0 0
  %1588 = vmatpush2.bf16.msra.mxu0 0
  %1589 = vmatprep.subr.bf16.mxu0 0
  %1590 = vmatpush2.bf16.msra.mxu0 0
  %1591 = vmatprep.mubr.bf16.mxu0 0
  %1592 = vmatmul.mubr.bf16.gmra.mxu0 %v1431
  %v1593 = vpop.f32.mrf.mxu0
  %v1594 = vadd.f32 %v159, %v1593
  %v1595 = vpop.f32.mrf.mxu0
  %v1596 = vpop.f32.mrf.mxu0
  %v1597 = vpop.f32.mrf.mxu0
  %1598 = vdwg.mxu0
  %v1599 = vmul.f32 %v1539, %v1594
  %v1600 = vadd.f32 %v1412, %v1599
  %v1601 = vtanh.pop %v1600
  %v1602 = vsub.f32 %v1406, %v1601
  %v1603 = vmul.f32 %v1546, %v1602
  %v1604 = vadd.f32 %v1601, %v1603
  %s1605 = scalar_lea.vmem %s3, 14
  %1606 = vst.msk [vmem:[%s1605] sm:$0x3] %vm219, %v1604
  // Predicated region
  $region14: #{uni_gru_forward.3} parent=0 // pred_check
    _
  $region15: #{uni_gru_forward.3} parent=0 // pred_check_branch
    %1608 = sbr.rel (0) target = $region17
  $region16: #{uni_gru_forward.3} parent=0 // pred_region
    _
  $region17: #{uni_gru_forward.3} parent=0 // pred_fallthru
    _
  // Predicated region
  $region18: #{uni_gru_forward.3} parent=0 // pred_check
    _
  $region19: #{uni_gru_forward.3} parent=0 // pred_check_branch
    %1610 = sbr.rel (0) target = $region21
  $region20: #{uni_gru_forward.3} parent=0 // pred_region
    _
  $region21: #{uni_gru_forward.3} parent=0 // pred_fallthru
    _

</llo_original>
